<compile_context>
chip_gen: v7x
topology: tpu7x:2x2x1
jax: 0.10.0
libtpu: 0.0.40
codegen_flags: <defaults>
</compile_context>

<pallas_src>
import math

import jax
import jax.numpy as jnp
import numpy as np
from jax.experimental import pallas as pl
from jax.experimental.pallas import tpu as pltpu


_LOG_EPS = float(math.log(1e-7))   # log of the softmax clamp used by the reference


def _multibox_kernel(loc_t_ref, conf_t_ref, loc_p_ref, logits_ref, mask_ref,
                     conf_loss_ref, neg_score_ref, scal_ref):
    """One (batch block, box tile) grid step.  The box axis (Nt) is on lanes.

    loc_t_ref  : (Bt, 4, Nt)  localisation targets
    conf_t_ref : (Bt, C, Nt)  class targets (one-hot / soft labels)
    loc_p_ref  : (Bt, 4, Nt)  localisation predictions
    logits_ref : (Bt, C, Nt)  class logits (pre-softmax)
    mask_ref   : (Bt, Nt)     positive-box indicator
    conf_loss_ref, neg_score_ref : (Bt, Nt)  per-box outputs
    scal_ref   : (Bt, 8)      packed per-image accumulators
                              [pos_conf_loss, pos_loc_loss, num_pos, 0, ...]
    """
    bt = mask_ref.shape[0]
    t = pl.program_id(1)

    @pl.when(t == 0)
    def _():
        scal_ref[...] = jnp.zeros_like(scal_ref)

    # Hoisted out of the unrolled loop (JAX does not CSE broadcast_in_dim).
    lane = jax.lax.broadcasted_iota(jnp.int32, (1, 8), 1)

    # Small static unroll over the batch rows of this block: each row works on
    # lane-dense 2-D (C, Nt) / (4, Nt) tiles with cheap sublane reductions.
    for b in range(bt):
        loc_t = loc_t_ref[b].astype(jnp.float32)              # (4, Nt)
        loc_p = loc_p_ref[b].astype(jnp.float32)              # (4, Nt)
        conf_t = conf_t_ref[b].astype(jnp.float32)            # (C, Nt)
        logits = logits_ref[b].astype(jnp.float32)            # (C, Nt)
        mask = mask_ref[pl.ds(b, 1), :].astype(jnp.float32)   # (1, Nt)

        # ---- log-softmax over the class (sublane) axis ----------------------
        m = jnp.max(logits, axis=0, keepdims=True)            # (1, Nt)
        e = jnp.exp(logits - m)                                # (C, Nt)  EUP
        s = jnp.sum(e, axis=0, keepdims=True)                  # (1, Nt)
        lse = m + jnp.log(s)                                    # (1, Nt)

        # clamped CE: log(max(softmax, 1e-7)) == max(logits - lse, log 1e-7)
        logp = jnp.maximum(logits - lse, _LOG_EPS)                     # (C, Nt)
        conf_loss = -jnp.sum(conf_t * logp, axis=0, keepdims=True)     # (1, Nt)

        # smooth-L1 localisation loss over the 4 coordinates
        d = loc_t - loc_p
        ad = jnp.abs(d)
        l1 = jnp.where(ad < 1.0, 0.5 * d * d, ad - 0.5)
        loc_loss = jnp.sum(l1, axis=0, keepdims=True)                  # (1, Nt)

        # hard-negative score: 1 - softmax[background=0]; reuse e and s
        bg = e[0:1, :] / s                                             # (1, Nt)
        neg_score = (1.0 - bg) * (1.0 - mask)                          # (1, Nt)

        conf_loss_ref[pl.ds(b, 1), :] = conf_loss
        neg_score_ref[pl.ds(b, 1), :] = neg_score

        # ---- per-image scalars packed on lanes 0..2, accumulated over t -----
        pos_conf = jnp.sum(conf_loss * mask, axis=1, keepdims=True)    # (1, 1)
        pos_loc = jnp.sum(loc_loss * mask, axis=1, keepdims=True)      # (1, 1)
        num_pos = jnp.sum(mask, axis=1, keepdims=True)                 # (1, 1)
        packed = (jnp.where(lane == 0, pos_conf, 0.0)
                  + jnp.where(lane == 1, pos_loc, 0.0)
                  + jnp.where(lane == 2, num_pos, 0.0))                # (1, 8)
        scal_ref[pl.ds(b, 1), :] += packed


def _choose_n_tile(n, max_tile):
    """Largest multiple-of-128 divisor of `n` that is <= max_tile (else n)."""
    if n <= max_tile:
        return n
    t = (max_tile // 128) * 128
    while t >= 128:
        if n % t == 0:
            return t
        t -= 128
    return n


def _choose_b_tile(b, max_b=8):
    """Largest divisor of `b` that is <= max_b (else b)."""
    if b <= max_b:
        return b
    for t in range(max_b, 0, -1):
        if b % t == 0:
            return t
    return b


def multibox_parts(y_true, y_pred_loc, y_pred_logits, *, num_classes,
                   background_label_id=0, max_n_tile=2048):
    """Runs the Pallas kernel, returns (conf_loss, neg_score, pos_conf, pos_loc, num_pos)."""
    assert background_label_id == 0, "kernel hard-codes background class 0"
    B, N, F = y_true.shape
    C = num_classes
    assert F == 4 + C + 1
    assert y_pred_loc.shape == (B, N, 4)
    assert y_pred_logits.shape == (B, N, C)

    f32 = jnp.float32   # compute dtype inside the kernel (v5e-safe)

    # Class-major (B, rows, N) layout so the box axis sits on TPU lanes and the
    # class reductions are cheap sublane reductions.  Real SSD conv heads are
    # naturally channel-major, so these transposes disappear upstream; here
    # they are the only wrapper-side layout work (no concat, no zero-pad rows,
    # no dtype upcast -- casts happen in-kernel after the DMA).
    loc_t = jnp.transpose(y_true[..., :4], (0, 2, 1))            # (B, 4, N)
    conf_t = jnp.transpose(y_true[..., 4:4 + C], (0, 2, 1))      # (B, C, N)
    mask = y_true[..., 4 + C]                                    # (B, N)
    loc_p = jnp.transpose(y_pred_loc, (0, 2, 1))                 # (B, 4, N)
    logits = jnp.transpose(y_pred_logits, (0, 2, 1))             # (B, C, N)

    n_tile = _choose_n_tile(N, max_n_tile)
    b_tile = _choose_b_tile(B)
    n_b = B // b_tile
    n_t = N // n_tile

    conf_loss, neg_score, scal = pl.pallas_call(
        _multibox_kernel,
        grid=(n_b, n_t),
        in_specs=[
            pl.BlockSpec((b_tile, 4, n_tile), lambda bb, t: (bb, 0, t)),
            pl.BlockSpec((b_tile, C, n_tile), lambda bb, t: (bb, 0, t)),
            pl.BlockSpec((b_tile, 4, n_tile), lambda bb, t: (bb, 0, t)),
            pl.BlockSpec((b_tile, C, n_tile), lambda bb, t: (bb, 0, t)),
            pl.BlockSpec((b_tile, n_tile), lambda bb, t: (bb, t)),
        ],
        out_specs=[
            pl.BlockSpec((b_tile, n_tile), lambda bb, t: (bb, t)),
            pl.BlockSpec((b_tile, n_tile), lambda bb, t: (bb, t)),
            pl.BlockSpec((b_tile, 8), lambda bb, t: (bb, 0)),   # accumulator over t
        ],
        out_shape=[
            jax.ShapeDtypeStruct((B, N), f32),
            jax.ShapeDtypeStruct((B, N), f32),
            jax.ShapeDtypeStruct((B, 8), f32),
        ],
        compiler_params=pltpu.CompilerParams(
            dimension_semantics=("parallel", "arbitrary"),
            # double-buffered blocks stay well under this on all of v5e/v6e/v7x
            vmem_limit_bytes=48 * 1024 * 1024),
    )(loc_t, conf_t, loc_p, logits, mask)

    pos_conf = scal[:, 0]
    pos_loc = scal[:, 1]
    num_pos = scal[:, 2]
    return conf_loss, neg_score, pos_conf, pos_loc, num_pos


def multibox_loss(y_true, y_pred_loc, y_pred_logits, *, num_classes,
                  alpha=1.0, neg_pos_ratio=3.0, background_label_id=0,
                  negatives_for_hard=100.0, max_n_tile=2048):
    B, N, _ = y_true.shape
    conf_loss, neg_score, pos_conf, pos_loc, num_pos = multibox_parts(
        y_true, y_pred_loc, y_pred_logits, num_classes=num_classes,
        background_label_id=background_label_id, max_n_tile=max_n_tile)

    num_boxes = jnp.float32(N)
    num_neg = jnp.minimum(neg_pos_ratio * num_pos, num_boxes - num_pos)
    has_min = jnp.sum((num_neg > 0).astype(jnp.float32))
    num_neg_batch = jnp.where(has_min > 0,
                              jnp.sum(num_neg),
                              jnp.float32(negatives_for_hard))
    k = num_neg_batch.astype(jnp.int32)   # matches int(...) truncation in torch

    # TODO(synk): dynamic-k torch.topk + gather has no clean Pallas equivalent;
    # a fused descending key/value sort + dynamic prefix mask is sum-equivalent
    # (up to tie ordering) and runs in XLA.
    flat_scores = neg_score.reshape(-1)
    flat_conf = conf_loss.reshape(-1)
    _, sorted_conf = jax.lax.sort_key_val(-flat_scores, flat_conf)
    neg_conf_sum = jnp.sum(
        jnp.where(jnp.arange(B * N) < k, sorted_conf, jnp.float32(0.0)))

    num_pos_c = jnp.where(num_pos != 0, num_pos, jnp.ones_like(num_pos))
    total = jnp.sum(pos_conf) + neg_conf_sum + alpha * jnp.sum(pos_loc)
    return total / jnp.sum(num_pos_c)


def _reference_parts(y_true, y_pred_loc, y_pred_logits, num_classes):
    """Pure-jnp mirror of the torch module's per-box math (for validation)."""
    probs = jax.nn.softmax(y_pred_logits, axis=-1)
    probs_c = jnp.maximum(probs, 1e-7)
    conf_loss = -jnp.sum(y_true[..., 4:4 + num_classes] * jnp.log(probs_c), axis=-1)
    d = y_true[..., :4] - y_pred_loc
    ad = jnp.abs(d)
    loc_loss = jnp.sum(jnp.where(ad < 1.0, 0.5 * d * d, ad - 0.5), axis=-1)
    mask = y_true[..., -1]
    neg_score = jnp.sum(probs[..., 1:], axis=-1) * (1.0 - mask)
    pos_conf = jnp.sum(conf_loss * mask, axis=1)
    pos_loc = jnp.sum(loc_loss * mask, axis=1)
    num_pos = jnp.sum(mask, axis=-1)
    return conf_loss, neg_score, pos_conf, pos_loc, num_pos


if __name__ == "__main__":
    key = jax.random.PRNGKey(0)
    B, N, C = 2, 1024, 8          # batch, num priors (boxes), num classes
    k1, k2, k3, k4, k5 = jax.random.split(key, 5)

    # y_true = [loc targets (4) | one-hot class targets (C) | positive mask (1)]
    loc_t = jax.random.normal(k1, (B, N, 4), jnp.float32)
    cls_ids = jax.random.randint(k2, (B, N), 0, C)
    conf_t = jax.nn.one_hot(cls_ids, C, dtype=jnp.float32)
    pos_mask = (jax.random.uniform(k3, (B, N)) < 0.25).astype(jnp.float32)
    y_true = jnp.concatenate([loc_t, conf_t, pos_mask[..., None]], axis=-1)

    # y_pred is a pair in the torch module: (loc predictions, class logits)
    y_pred_loc = jax.random.normal(k4, (B, N, 4), jnp.float32)
    y_pred_logits = jax.random.normal(k5, (B, N, C), jnp.float32)

    # Validate the kernel's per-box / per-batch quantities against pure JAX
    # (max_n_tile=512 so the multi-tile accumulation path is exercised).
    parts = multibox_parts(y_true, y_pred_loc, y_pred_logits,
                           num_classes=C, max_n_tile=512)
    ref = _reference_parts(y_true, y_pred_loc, y_pred_logits, C)
    for got, want in zip(parts, ref):
        np.testing.assert_allclose(np.asarray(got), np.asarray(want),
                                   rtol=5e-4, atol=5e-5)

    loss = multibox_loss(y_true, y_pred_loc, y_pred_logits,
                         num_classes=C, max_n_tile=512)
    jax.block_until_ready(loss)
    print("KERNEL_OK")
</pallas_src>

<mosaic_0001>
module attributes {stable_mosaic.version = 11 : i64} {
  func.func @_multibox_kernel(%arg0: i32, %arg1: i32, %arg2: memref<2x4x512xf32, #tpu.memory_space<vmem>>, %arg3: memref<2x8x512xf32, #tpu.memory_space<vmem>>, %arg4: memref<2x4x512xf32, #tpu.memory_space<vmem>>, %arg5: memref<2x8x512xf32, #tpu.memory_space<vmem>>, %arg6: memref<2x512xf32, #tpu.memory_space<vmem>>, %arg7: memref<2x512xf32, #tpu.memory_space<vmem>>, %arg8: memref<2x512xf32, #tpu.memory_space<vmem>>, %arg9: memref<2x8xf32, #tpu.memory_space<vmem>>) attributes {dimension_semantics = [#tpu.dimension_semantics<parallel>, #tpu.dimension_semantics<arbitrary>], iteration_bounds = array<i64: 1, 2>, scalar_prefetch = 0 : i64, scratch_operands = 0 : i64, tpu.core_type = #tpu.core_type<tc>, window_params = [{transform_indices = @transform_0, window_bounds = array<i64: 2, 4, 512>}, {transform_indices = @transform_1, window_bounds = array<i64: 2, 8, 512>}, {transform_indices = @transform_2, window_bounds = array<i64: 2, 4, 512>}, {transform_indices = @transform_3, window_bounds = array<i64: 2, 8, 512>}, {transform_indices = @transform_4, window_bounds = array<i64: 2, 512>}, {transform_indices = @transform_5, window_bounds = array<i64: 2, 512>}, {transform_indices = @transform_6, window_bounds = array<i64: 2, 512>}, {transform_indices = @transform_7, window_bounds = array<i64: 2, 8>}]} {
    %c0_i32 = arith.constant 0 : i32
    %0 = arith.cmpi eq, %arg1, %c0_i32 : i32
    %1 = arith.extui %0 : i1 to i32
    %c0_i32_0 = arith.constant 0 : i32
    %2 = arith.cmpi ne, %1, %c0_i32_0 : i32
    scf.if %2 {
      %cst_80 = arith.constant 0.000000e+00 : f32
      %162 = vector.broadcast %cst_80 : f32 to vector<2x8xf32>
      %c0_81 = arith.constant 0 : index
      %c0_82 = arith.constant 0 : index
      %163 = vector.load %arg9[%c0_81, %c0_82] : memref<2x8xf32, #tpu.memory_space<vmem>>, vector<2x8xf32>
      tpu.vector_store %arg9[%c0_81, %c0_82], %162 {strides = array<i32>} : memref<2x8xf32, #tpu.memory_space<vmem>>, vector<2x8xf32>,
    } else {
    }
    %3 = tpu.iota {dimensions = array<i32: 1>} : vector<1x8xi32>
    %c0 = arith.constant 0 : index
    %c0_1 = arith.constant 0 : index
    %c0_2 = arith.constant 0 : index
    %4 = vector.load %arg2[%c0, %c0_1, %c0_2] : memref<2x4x512xf32, #tpu.memory_space<vmem>>, vector<1x4x512xf32>
    %5 = vector.shape_cast %4 : vector<1x4x512xf32> to vector<4x512xf32>
    %c0_3 = arith.constant 0 : index
    %c0_4 = arith.constant 0 : index
    %c0_5 = arith.constant 0 : index
    %6 = vector.load %arg4[%c0_3, %c0_4, %c0_5] : memref<2x4x512xf32, #tpu.memory_space<vmem>>, vector<1x4x512xf32>
    %7 = vector.shape_cast %6 : vector<1x4x512xf32> to vector<4x512xf32>
    %c0_6 = arith.constant 0 : index
    %c0_7 = arith.constant 0 : index
    %c0_8 = arith.constant 0 : index
    %8 = vector.load %arg3[%c0_6, %c0_7, %c0_8] : memref<2x8x512xf32, #tpu.memory_space<vmem>>, vector<1x8x512xf32>
    %9 = vector.shape_cast %8 : vector<1x8x512xf32> to vector<8x512xf32>
    %c0_9 = arith.constant 0 : index
    %c0_10 = arith.constant 0 : index
    %c0_11 = arith.constant 0 : index
    %10 = vector.load %arg5[%c0_9, %c0_10, %c0_11] : memref<2x8x512xf32, #tpu.memory_space<vmem>>, vector<1x8x512xf32>
    %11 = vector.shape_cast %10 : vector<1x8x512xf32> to vector<8x512xf32>
    %c0_12 = arith.constant 0 : index
    %c0_13 = arith.constant 0 : index
    %12 = vector.load %arg6[%c0_12, %c0_13] : memref<2x512xf32, #tpu.memory_space<vmem>>, vector<1x512xf32>
    %cst = arith.constant dense<0xFF800000> : vector<512xf32>
    %13 = vector.multi_reduction <maximumf>, %11, %cst [0] : vector<8x512xf32> to vector<512xf32>
    %14 = vector.shape_cast %13 : vector<512xf32> to vector<1x512xf32>
    %15 = vector.broadcast %14 : vector<1x512xf32> to vector<8x512xf32>
    %16 = arith.subf %11, %15 : vector<8x512xf32>
    %17 = math.exp %16 : vector<8x512xf32>
    %cst_14 = arith.constant dense<0.000000e+00> : vector<512xf32>
    %18 = vector.multi_reduction <add>, %17, %cst_14 [0] : vector<8x512xf32> to vector<512xf32>
    %19 = vector.shape_cast %18 : vector<512xf32> to vector<1x512xf32>
    %20 = math.log %19 : vector<1x512xf32>
    %21 = arith.addf %14, %20 : vector<1x512xf32>
    %22 = vector.broadcast %21 : vector<1x512xf32> to vector<8x512xf32>
    %23 = arith.subf %11, %22 : vector<8x512xf32>
    %cst_15 = arith.constant -16.1180954 : f32
    %24 = vector.broadcast %cst_15 : f32 to vector<8x512xf32>
    %25 = arith.maximumf %23, %24 : vector<8x512xf32>
    %26 = arith.mulf %9, %25 : vector<8x512xf32>
    %cst_16 = arith.constant dense<0.000000e+00> : vector<512xf32>
    %27 = vector.multi_reduction <add>, %26, %cst_16 [0] : vector<8x512xf32> to vector<512xf32>
    %28 = vector.shape_cast %27 : vector<512xf32> to vector<1x512xf32>
    %cst_17 = arith.constant 0.000000e+00 : f32
    %29 = vector.broadcast %cst_17 : f32 to vector<1x512xf32>
    %30 = arith.subf %29, %28 : vector<1x512xf32>
    %31 = arith.subf %5, %7 : vector<4x512xf32>
    %32 = math.absf %31 : vector<4x512xf32>
    %cst_18 = arith.constant 1.000000e+00 : f32
    %33 = vector.broadcast %cst_18 : f32 to vector<4x512xf32>
    %34 = arith.cmpf olt, %32, %33 : vector<4x512xf32>
    %cst_19 = arith.constant 5.000000e-01 : f32
    %35 = vector.broadcast %cst_19 : f32 to vector<4x512xf32>
    %36 = arith.mulf %35, %31 : vector<4x512xf32>
    %37 = arith.mulf %36, %31 : vector<4x512xf32>
    %cst_20 = arith.constant 5.000000e-01 : f32
    %38 = vector.broadcast %cst_20 : f32 to vector<4x512xf32>
    %39 = arith.subf %32, %38 : vector<4x512xf32>
    %40 = arith.select %34, %37, %39 : vector<4x512xi1>, vector<4x512xf32>
    %cst_21 = arith.constant dense<0.000000e+00> : vector<512xf32>
    %41 = vector.multi_reduction <add>, %40, %cst_21 [0] : vector<4x512xf32> to vector<512xf32>
    %42 = vector.shape_cast %41 : vector<512xf32> to vector<1x512xf32>
    %43 = vector.extract_strided_slice %17 {offsets = [0, 0], sizes = [1, 512], strides = [1, 1]} : vector<8x512xf32> to vector<1x512xf32>
    %44 = arith.divf %43, %19 : vector<1x512xf32>
    %cst_22 = arith.constant 1.000000e+00 : f32
    %45 = vector.broadcast %cst_22 : f32 to vector<1x512xf32>
    %46 = arith.subf %45, %44 : vector<1x512xf32>
    %cst_23 = arith.constant 1.000000e+00 : f32
    %47 = vector.broadcast %cst_23 : f32 to vector<1x512xf32>
    %48 = arith.subf %47, %12 : vector<1x512xf32>
    %49 = arith.mulf %46, %48 : vector<1x512xf32>
    %c0_24 = arith.constant 0 : index
    %c0_25 = arith.constant 0 : index
    %50 = vector.load %arg7[%c0_24, %c0_25] : memref<2x512xf32, #tpu.memory_space<vmem>>, vector<1x512xf32>
    tpu.vector_store %arg7[%c0_24, %c0_25], %30 {strides = array<i32>} : memref<2x512xf32, #tpu.memory_space<vmem>>, vector<1x512xf32>,
    %c0_26 = arith.constant 0 : index
    %c0_27 = arith.constant 0 : index
    %51 = vector.load %arg8[%c0_26, %c0_27] : memref<2x512xf32, #tpu.memory_space<vmem>>, vector<1x512xf32>
    tpu.vector_store %arg8[%c0_26, %c0_27], %49 {strides = array<i32>} : memref<2x512xf32, #tpu.memory_space<vmem>>, vector<1x512xf32>,
    %52 = arith.mulf %30, %12 : vector<1x512xf32>
    %cst_28 = arith.constant dense<0.000000e+00> : vector<1xf32>
    %53 = vector.multi_reduction <add>, %52, %cst_28 [1] : vector<1x512xf32> to vector<1xf32>
    %54 = vector.shape_cast %53 : vector<1xf32> to vector<1x1xf32>
    %55 = arith.mulf %42, %12 : vector<1x512xf32>
    %cst_29 = arith.constant dense<0.000000e+00> : vector<1xf32>
    %56 = vector.multi_reduction <add>, %55, %cst_29 [1] : vector<1x512xf32> to vector<1xf32>
    %57 = vector.shape_cast %56 : vector<1xf32> to vector<1x1xf32>
    %cst_30 = arith.constant dense<0.000000e+00> : vector<1xf32>
    %58 = vector.multi_reduction <add>, %12, %cst_30 [1] : vector<1x512xf32> to vector<1xf32>
    %59 = vector.shape_cast %58 : vector<1xf32> to vector<1x1xf32>
    %c0_i32_31 = arith.constant 0 : i32
    %60 = vector.broadcast %c0_i32_31 : i32 to vector<1x8xi32>
    %61 = arith.cmpi eq, %3, %60 : vector<1x8xi32>
    %cst_32 = arith.constant 0.000000e+00 : f32
    %62 = vector.shape_cast %54 : vector<1x1xf32> to vector<1x1xf32>
    %63 = vector.broadcast %62 : vector<1x1xf32> to vector<1x8xf32>
    %64 = vector.broadcast %cst_32 : f32 to vector<1x8xf32>
    %65 = arith.select %61, %63, %64 : vector<1x8xi1>, vector<1x8xf32>
    %c1_i32 = arith.constant 1 : i32
    %66 = vector.broadcast %c1_i32 : i32 to vector<1x8xi32>
    %67 = arith.cmpi eq, %3, %66 : vector<1x8xi32>
    %cst_33 = arith.constant 0.000000e+00 : f32
    %68 = vector.shape_cast %57 : vector<1x1xf32> to vector<1x1xf32>
    %69 = vector.broadcast %68 : vector<1x1xf32> to vector<1x8xf32>
    %70 = vector.broadcast %cst_33 : f32 to vector<1x8xf32>
    %71 = arith.select %67, %69, %70 : vector<1x8xi1>, vector<1x8xf32>
    %72 = arith.addf %65, %71 : vector<1x8xf32>
    %c2_i32 = arith.constant 2 : i32
    %73 = vector.broadcast %c2_i32 : i32 to vector<1x8xi32>
    %74 = arith.cmpi eq, %3, %73 : vector<1x8xi32>
    %cst_34 = arith.constant 0.000000e+00 : f32
    %75 = vector.shape_cast %59 : vector<1x1xf32> to vector<1x1xf32>
    %76 = vector.broadcast %75 : vector<1x1xf32> to vector<1x8xf32>
    %77 = vector.broadcast %cst_34 : f32 to vector<1x8xf32>
    %78 = arith.select %74, %76, %77 : vector<1x8xi1>, vector<1x8xf32>
    %79 = arith.addf %72, %78 : vector<1x8xf32>
    %c0_35 = arith.constant 0 : index
    %c0_36 = arith.constant 0 : index
    %80 = vector.load %arg9[%c0_35, %c0_36] : memref<2x8xf32, #tpu.memory_space<vmem>>, vector<1x8xf32>
    %81 = arith.addf %80, %79 : vector<1x8xf32>
    %c0_37 = arith.constant 0 : index
    %c0_38 = arith.constant 0 : index
    %82 = vector.load %arg9[%c0_37, %c0_38] : memref<2x8xf32, #tpu.memory_space<vmem>>, vector<1x8xf32>
    tpu.vector_store %arg9[%c0_37, %c0_38], %81 {strides = array<i32>} : memref<2x8xf32, #tpu.memory_space<vmem>>, vector<1x8xf32>,
    %c1 = arith.constant 1 : index
    %c0_39 = arith.constant 0 : index
    %c0_40 = arith.constant 0 : index
    %83 = vector.load %arg2[%c1, %c0_39, %c0_40] : memref<2x4x512xf32, #tpu.memory_space<vmem>>, vector<1x4x512xf32>
    %84 = vector.shape_cast %83 : vector<1x4x512xf32> to vector<4x512xf32>
    %c1_41 = arith.constant 1 : index
    %c0_42 = arith.constant 0 : index
    %c0_43 = arith.constant 0 : index
    %85 = vector.load %arg4[%c1_41, %c0_42, %c0_43] : memref<2x4x512xf32, #tpu.memory_space<vmem>>, vector<1x4x512xf32>
    %86 = vector.shape_cast %85 : vector<1x4x512xf32> to vector<4x512xf32>
    %c1_44 = arith.constant 1 : index
    %c0_45 = arith.constant 0 : index
    %c0_46 = arith.constant 0 : index
    %87 = vector.load %arg3[%c1_44, %c0_45, %c0_46] : memref<2x8x512xf32, #tpu.memory_space<vmem>>, vector<1x8x512xf32>
    %88 = vector.shape_cast %87 : vector<1x8x512xf32> to vector<8x512xf32>
    %c1_47 = arith.constant 1 : index
    %c0_48 = arith.constant 0 : index
    %c0_49 = arith.constant 0 : index
    %89 = vector.load %arg5[%c1_47, %c0_48, %c0_49] : memref<2x8x512xf32, #tpu.memory_space<vmem>>, vector<1x8x512xf32>
    %90 = vector.shape_cast %89 : vector<1x8x512xf32> to vector<8x512xf32>
    %c1_50 = arith.constant 1 : index
    %c0_51 = arith.constant 0 : index
    %91 = vector.load %arg6[%c1_50, %c0_51] : memref<2x512xf32, #tpu.memory_space<vmem>>, vector<1x512xf32>
    %cst_52 = arith.constant dense<0xFF800000> : vector<512xf32>
    %92 = vector.multi_reduction <maximumf>, %90, %cst_52 [0] : vector<8x512xf32> to vector<512xf32>
    %93 = vector.shape_cast %92 : vector<512xf32> to vector<1x512xf32>
    %94 = vector.broadcast %93 : vector<1x512xf32> to vector<8x512xf32>
    %95 = arith.subf %90, %94 : vector<8x512xf32>
    %96 = math.exp %95 : vector<8x512xf32>
    %cst_53 = arith.constant dense<0.000000e+00> : vector<512xf32>
    %97 = vector.multi_reduction <add>, %96, %cst_53 [0] : vector<8x512xf32> to vector<512xf32>
    %98 = vector.shape_cast %97 : vector<512xf32> to vector<1x512xf32>
    %99 = math.log %98 : vector<1x512xf32>
    %100 = arith.addf %93, %99 : vector<1x512xf32>
    %101 = vector.broadcast %100 : vector<1x512xf32> to vector<8x512xf32>
    %102 = arith.subf %90, %101 : vector<8x512xf32>
    %cst_54 = arith.constant -16.1180954 : f32
    %103 = vector.broadcast %cst_54 : f32 to vector<8x512xf32>
    %104 = arith.maximumf %102, %103 : vector<8x512xf32>
    %105 = arith.mulf %88, %104 : vector<8x512xf32>
    %cst_55 = arith.constant dense<0.000000e+00> : vector<512xf32>
    %106 = vector.multi_reduction <add>, %105, %cst_55 [0] : vector<8x512xf32> to vector<512xf32>
    %107 = vector.shape_cast %106 : vector<512xf32> to vector<1x512xf32>
    %cst_56 = arith.constant 0.000000e+00 : f32
    %108 = vector.broadcast %cst_56 : f32 to vector<1x512xf32>
    %109 = arith.subf %108, %107 : vector<1x512xf32>
    %110 = arith.subf %84, %86 : vector<4x512xf32>
    %111 = math.absf %110 : vector<4x512xf32>
    %cst_57 = arith.constant 1.000000e+00 : f32
    %112 = vector.broadcast %cst_57 : f32 to vector<4x512xf32>
    %113 = arith.cmpf olt, %111, %112 : vector<4x512xf32>
    %cst_58 = arith.constant 5.000000e-01 : f32
    %114 = vector.broadcast %cst_58 : f32 to vector<4x512xf32>
    %115 = arith.mulf %114, %110 : vector<4x512xf32>
    %116 = arith.mulf %115, %110 : vector<4x512xf32>
    %cst_59 = arith.constant 5.000000e-01 : f32
    %117 = vector.broadcast %cst_59 : f32 to vector<4x512xf32>
    %118 = arith.subf %111, %117 : vector<4x512xf32>
    %119 = arith.select %113, %116, %118 : vector<4x512xi1>, vector<4x512xf32>
    %cst_60 = arith.constant dense<0.000000e+00> : vector<512xf32>
    %120 = vector.multi_reduction <add>, %119, %cst_60 [0] : vector<4x512xf32> to vector<512xf32>
    %121 = vector.shape_cast %120 : vector<512xf32> to vector<1x512xf32>
    %122 = vector.extract_strided_slice %96 {offsets = [0, 0], sizes = [1, 512], strides = [1, 1]} : vector<8x512xf32> to vector<1x512xf32>
    %123 = arith.divf %122, %98 : vector<1x512xf32>
    %cst_61 = arith.constant 1.000000e+00 : f32
    %124 = vector.broadcast %cst_61 : f32 to vector<1x512xf32>
    %125 = arith.subf %124, %123 : vector<1x512xf32>
    %cst_62 = arith.constant 1.000000e+00 : f32
    %126 = vector.broadcast %cst_62 : f32 to vector<1x512xf32>
    %127 = arith.subf %126, %91 : vector<1x512xf32>
    %128 = arith.mulf %125, %127 : vector<1x512xf32>
    %c1_63 = arith.constant 1 : index
    %c0_64 = arith.constant 0 : index
    %129 = vector.load %arg7[%c1_63, %c0_64] : memref<2x512xf32, #tpu.memory_space<vmem>>, vector<1x512xf32>
    tpu.vector_store %arg7[%c1_63, %c0_64], %109 {strides = array<i32>} : memref<2x512xf32, #tpu.memory_space<vmem>>, vector<1x512xf32>,
    %c1_65 = arith.constant 1 : index
    %c0_66 = arith.constant 0 : index
    %130 = vector.load %arg8[%c1_65, %c0_66] : memref<2x512xf32, #tpu.memory_space<vmem>>, vector<1x512xf32>
    tpu.vector_store %arg8[%c1_65, %c0_66], %128 {strides = array<i32>} : memref<2x512xf32, #tpu.memory_space<vmem>>, vector<1x512xf32>,
    %131 = arith.mulf %109, %91 : vector<1x512xf32>
    %cst_67 = arith.constant dense<0.000000e+00> : vector<1xf32>
    %132 = vector.multi_reduction <add>, %131, %cst_67 [1] : vector<1x512xf32> to vector<1xf32>
    %133 = vector.shape_cast %132 : vector<1xf32> to vector<1x1xf32>
    %134 = arith.mulf %121, %91 : vector<1x512xf32>
    %cst_68 = arith.constant dense<0.000000e+00> : vector<1xf32>
    %135 = vector.multi_reduction <add>, %134, %cst_68 [1] : vector<1x512xf32> to vector<1xf32>
    %136 = vector.shape_cast %135 : vector<1xf32> to vector<1x1xf32>
    %cst_69 = arith.constant dense<0.000000e+00> : vector<1xf32>
    %137 = vector.multi_reduction <add>, %91, %cst_69 [1] : vector<1x512xf32> to vector<1xf32>
    %138 = vector.shape_cast %137 : vector<1xf32> to vector<1x1xf32>
    %c0_i32_70 = arith.constant 0 : i32
    %139 = vector.broadcast %c0_i32_70 : i32 to vector<1x8xi32>
    %140 = arith.cmpi eq, %3, %139 : vector<1x8xi32>
    %cst_71 = arith.constant 0.000000e+00 : f32
    %141 = vector.shape_cast %133 : vector<1x1xf32> to vector<1x1xf32>
    %142 = vector.broadcast %141 : vector<1x1xf32> to vector<1x8xf32>
    %143 = vector.broadcast %cst_71 : f32 to vector<1x8xf32>
    %144 = arith.select %140, %142, %143 : vector<1x8xi1>, vector<1x8xf32>
    %c1_i32_72 = arith.constant 1 : i32
    %145 = vector.broadcast %c1_i32_72 : i32 to vector<1x8xi32>
    %146 = arith.cmpi eq, %3, %145 : vector<1x8xi32>
    %cst_73 = arith.constant 0.000000e+00 : f32
    %147 = vector.shape_cast %136 : vector<1x1xf32> to vector<1x1xf32>
    %148 = vector.broadcast %147 : vector<1x1xf32> to vector<1x8xf32>
    %149 = vector.broadcast %cst_73 : f32 to vector<1x8xf32>
    %150 = arith.select %146, %148, %149 : vector<1x8xi1>, vector<1x8xf32>
    %151 = arith.addf %144, %150 : vector<1x8xf32>
    %c2_i32_74 = arith.constant 2 : i32
    %152 = vector.broadcast %c2_i32_74 : i32 to vector<1x8xi32>
    %153 = arith.cmpi eq, %3, %152 : vector<1x8xi32>
    %cst_75 = arith.constant 0.000000e+00 : f32
    %154 = vector.shape_cast %138 : vector<1x1xf32> to vector<1x1xf32>
    %155 = vector.broadcast %154 : vector<1x1xf32> to vector<1x8xf32>
    %156 = vector.broadcast %cst_75 : f32 to vector<1x8xf32>
    %157 = arith.select %153, %155, %156 : vector<1x8xi1>, vector<1x8xf32>
    %158 = arith.addf %151, %157 : vector<1x8xf32>
    %c1_76 = arith.constant 1 : index
    %c0_77 = arith.constant 0 : index
    %159 = vector.load %arg9[%c1_76, %c0_77] : memref<2x8xf32, #tpu.memory_space<vmem>>, vector<1x8xf32>
    %160 = arith.addf %159, %158 : vector<1x8xf32>
    %c1_78 = arith.constant 1 : index
    %c0_79 = arith.constant 0 : index
    %161 = vector.load %arg9[%c1_78, %c0_79] : memref<2x8xf32, #tpu.memory_space<vmem>>, vector<1x8xf32>
    tpu.vector_store %arg9[%c1_78, %c0_79], %160 {strides = array<i32>} : memref<2x8xf32, #tpu.memory_space<vmem>>, vector<1x8xf32>,
    return
  }
  func.func @transform_0(%arg0: i32, %arg1: i32) -> (i32, i32, i32) {
    %c0_i32 = arith.constant 0 : i32
    %c0_i32_0 = arith.constant 0 : i32
    return %arg0, %c0_i32, %arg1 : i32, i32, i32
  }
  func.func @transform_1(%arg0: i32, %arg1: i32) -> (i32, i32, i32) {
    %c0_i32 = arith.constant 0 : i32
    %c0_i32_0 = arith.constant 0 : i32
    return %arg0, %c0_i32, %arg1 : i32, i32, i32
  }
  func.func @transform_2(%arg0: i32, %arg1: i32) -> (i32, i32, i32) {
    %c0_i32 = arith.constant 0 : i32
    %c0_i32_0 = arith.constant 0 : i32
    return %arg0, %c0_i32, %arg1 : i32, i32, i32
  }
  func.func @transform_3(%arg0: i32, %arg1: i32) -> (i32, i32, i32) {
    %c0_i32 = arith.constant 0 : i32
    %c0_i32_0 = arith.constant 0 : i32
    return %arg0, %c0_i32, %arg1 : i32, i32, i32
  }
  func.func @transform_4(%arg0: i32, %arg1: i32) -> (i32, i32) {
    %c0_i32 = arith.constant 0 : i32
    return %arg0, %arg1 : i32, i32
  }
  func.func @transform_5(%arg0: i32, %arg1: i32) -> (i32, i32) {
    %c0_i32 = arith.constant 0 : i32
    return %arg0, %arg1 : i32, i32
  }
  func.func @transform_6(%arg0: i32, %arg1: i32) -> (i32, i32) {
    %c0_i32 = arith.constant 0 : i32
    return %arg0, %arg1 : i32, i32
  }
  func.func @transform_7(%arg0: i32, %arg1: i32) -> (i32, i32) {
    %c0_i32 = arith.constant 0 : i32
    %c0_i32_0 = arith.constant 0 : i32
    return %arg0, %c0_i32 : i32, i32
  }
}

</mosaic_0001>

<llo_original>
// kernel: tpu_custom_call.1
$region0: #{tpu_custom_call.1}
  #allocation0 [shape = 'u32[]', space=smem, size = 0x4, offset = 0x4, fixed_abs, tag = 'smem constant byte address 0x4 - core index']
  #allocation1 [shape = 'u32[144,128]{1,0:T(1,128)}', space=vmem, size = 0x12000, scoped, tag = 'internal scratch']
  %s0 = inlined_call_operand.hbm [shape: f32[2,4,1024], index: 0, kind: input, shape index: {}]
  %s1 = inlined_call_operand.hbm [shape: f32[2,8,1024], index: 1, kind: input, shape index: {}]
  %s2 = inlined_call_operand.hbm [shape: f32[2,4,1024], index: 2, kind: input, shape index: {}]
  %s3 = inlined_call_operand.hbm [shape: f32[2,8,1024], index: 3, kind: input, shape index: {}]
  %s4 = inlined_call_operand.hbm [shape: f32[2,1024], index: 4, kind: input, shape index: {}]
  %s5 = inlined_call_operand.hbm [shape: f32[2,1024], index: 5, kind: output, shape index: {0}]
  %s6 = inlined_call_operand.hbm [shape: f32[2,1024], index: 6, kind: output, shape index: {1}]
  %s7 = inlined_call_operand.hbm [shape: f32[2,8], index: 7, kind: output, shape index: {2}]
  %8 = xla_tuple %s5, %s6, %s7
  %s9 = sld [smem:[#allocation0]]
  $region93: #{tpu_custom_call.1} parent=0
    _
  %s11 = ssub.s32 1, %s9
  %s12 = scalar_select 0, %s11, %s9
  $region1: #{tpu_custom_call.1} parent=0
    #allocation2 [shape = 'u8[32768]{0}', space=vmem, size = 0x8000, scoped, tag = 'input window, operand 0']
    #allocation3 [shape = 's32[2]{0}', space=sflag, size = 0x8, scoped, tag = 'scoped memory for tpu_custom_call.1']
    #allocation4 [shape = 's32[2]{0}', space=sflag, size = 0x8, scoped, tag = 'scoped memory for tpu_custom_call.1']
    #allocation5 [shape = 'u8[65536]{0}', space=vmem, size = 0x10000, scoped, tag = 'input window, operand 1']
    #allocation6 [shape = 's32[2]{0}', space=sflag, size = 0x8, scoped, tag = 'scoped memory for tpu_custom_call.1']
    #allocation7 [shape = 'u8[32768]{0}', space=vmem, size = 0x8000, scoped, tag = 'input window, operand 2']
    #allocation8 [shape = 'u8[65536]{0}', space=vmem, size = 0x10000, scoped, tag = 'input window, operand 3']
    #allocation9 [shape = 's32[2]{0}', space=sflag, size = 0x8, scoped, tag = 'scoped memory for tpu_custom_call.1']
    #allocation10 [shape = 'u8[8192]{0}', space=vmem, size = 0x2000, scoped, tag = 'input window, operand 4']
    #allocation11 [shape = 'u8[8192]{0}', space=vmem, size = 0x2000, scoped, tag = 'output window, operand 0']
    #allocation12 [shape = 'u8[8192]{0}', space=vmem, size = 0x2000, scoped, tag = 'output window, operand 1']
    #allocation13 [shape = 's32[2]{0}', space=sflag, size = 0x8, scoped, tag = 'scoped memory for tpu_custom_call.1']
    #allocation14 [shape = 'u8[1024]{0}', space=vmem, size = 0x400, scoped, tag = 'output window, operand 2, single buffered']
    %13 = vsyncpa [#allocation3], 0
    %s14 = scalar_lea.sflag [#allocation3], 1
    %15 = vsyncpa %s14, 0
    %16 = vsyncpa [#allocation6], 0
    %s17 = scalar_lea.sflag [#allocation6], 1
    %18 = vsyncpa %s17, 0
    %19 = vsyncpa [#allocation9], 0
    %s20 = scalar_lea.sflag [#allocation9], 1
    %21 = vsyncpa %s20, 0
    %22 = vsyncpa [#allocation4], 0
    %s23 = scalar_lea.sflag [#allocation4], 1
    %24 = vsyncpa %s23, 0
    %25 = vsyncpa [#allocation13], 0
    %s26 = scalar_lea.sflag [#allocation13], 1
    %27 = vsyncpa %s26, 0
    loop: start=0, step=1, limit=4
    $region2: #{tpu_custom_call.1} parent=1 // loop_pre_header
      _
    $region3: #{tpu_custom_call.1} parent=1 // loop_header
      %s29 = sphi 0, %s33
      %p30 = scmp.ge.s32.totalorder %s29, 4
      %s36 = sphi 0, %s48
      %s37 = sphi 0, %s44
      %s38 = sphi 0, %s36
      %s39 = sphi 0, %s37
      %s40 = sphi 0, %s38
      %s41 = sphi 0, %s39
      %s53 = sphi 0, %s55
      %s56 = sphi 0, %s53
      %s57 = sphi 0, %s56
      %s73 = sphi 0, %s57
      %s81 = sphi 0, %s83
      %s84 = sphi 0, %s81
      %s85 = sphi 0, %s84
      %s101 = sphi 0, %s85
      %s109 = sphi 0, %s111
      %s112 = sphi 0, %s109
      %s113 = sphi 0, %s112
      %s129 = sphi 0, %s113
      %s137 = sphi 0, %s139
      %s140 = sphi 0, %s137
      %s141 = sphi 0, %s140
      %s157 = sphi 0, %s141
      %s165 = sphi 0, %s167
      %s168 = sphi 0, %s165
      %s169 = sphi 0, %s168
      %s185 = sphi 0, %s169
      %s193 = sphi 0, %s195
      %s196 = sphi 0, %s193
      %s197 = sphi 0, %s196
      %s213 = sphi 0, %s197
      %s221 = sphi 0, %s223
      %s224 = sphi 0, %s221
      %s225 = sphi 0, %s224
      %s241 = sphi 0, %s225
      %s247 = sphi 0, %s249
      %s250 = sphi 0, %s247
      %s251 = sphi 0, %s250
      %s267 = sphi 0, %s251
    $region4: #{tpu_custom_call.1} parent=1 // loop_header_branch
      %32 = sbr.rel (%p30) target = $region8
    $region5: #{tpu_custom_call.1} parent=1 // loop_body
      %s34 = ssub.s32 %s29, 1
      %s35 = ssub.s32 %s29, 2
      %s42 = sadd.s32 1, %s37
      %p43 = scmp.ge.s32.totalorder %s42, 2
      %s44 = scalar_select %p43, 0, %s42
      %s45 = sadd.s32 1, %s36
      %s46 = scalar_select %p43, %s45, %s36
      %p47 = scmp.ge.s32.totalorder %s46, 1
      %s48 = scalar_select %p47, 0, %s46
      %s49 = ssub.s32 %s36, %s48
      %s50 = ssub.s32 %s37, %s44
      %s51 = sor.u32 %s49, %s50
      %p52 = scmp.eq.s32.totalorder %s51, 0
      %s54 = sadd.s32 %s53, 1
      %s55 = scalar_select %p52, %s53, %s54
      %p58 = pneg %p52
      %p59 = scmp.eq.s32.totalorder %s29, 1
      %p60 = por %p58, %p59
      %p61 = scmp.ne.s32.totalorder %s53, %s56
      %p62 = scmp.eq.s32.totalorder %s29, 0
      %p63 = por %p61, %p62
      %p64 = scmp.ne.s32.totalorder %s53, %s56
      %p65 = scmp.eq.s32.totalorder %s34, 1
      %p66 = por %p64, %p65
      %p67 = scmp.ne.s32.totalorder %s56, %s57
      %p68 = scmp.eq.s32.totalorder %s34, 0
      %p69 = por %p67, %p68
      %p70 = scmp.ne.s32.totalorder %s56, %s57
      %p71 = scmp.eq.s32.totalorder %s35, 1
      %p72 = por %p70, %p71
      %p74 = scmp.ne.s32.totalorder %s57, %s73
      %p75 = scmp.eq.s32.totalorder %s35, 0
      %p76 = por %p74, %p75
      %s77 = ssub.s32 %s36, %s48
      %s78 = ssub.s32 %s37, %s44
      %s79 = sor.u32 %s77, %s78
      %p80 = scmp.eq.s32.totalorder %s79, 0
      %s82 = sadd.s32 %s81, 1
      %s83 = scalar_select %p80, %s81, %s82
      %p86 = pneg %p80
      %p87 = scmp.eq.s32.totalorder %s29, 1
      %p88 = por %p86, %p87
      %p89 = scmp.ne.s32.totalorder %s81, %s84
      %p90 = scmp.eq.s32.totalorder %s29, 0
      %p91 = por %p89, %p90
      %p92 = scmp.ne.s32.totalorder %s81, %s84
      %p93 = scmp.eq.s32.totalorder %s34, 1
      %p94 = por %p92, %p93
      %p95 = scmp.ne.s32.totalorder %s84, %s85
      %p96 = scmp.eq.s32.totalorder %s34, 0
      %p97 = por %p95, %p96
      %p98 = scmp.ne.s32.totalorder %s84, %s85
      %p99 = scmp.eq.s32.totalorder %s35, 1
      %p100 = por %p98, %p99
      %p102 = scmp.ne.s32.totalorder %s85, %s101
      %p103 = scmp.eq.s32.totalorder %s35, 0
      %p104 = por %p102, %p103
      %s105 = ssub.s32 %s36, %s48
      %s106 = ssub.s32 %s37, %s44
      %s107 = sor.u32 %s105, %s106
      %p108 = scmp.eq.s32.totalorder %s107, 0
      %s110 = sadd.s32 %s109, 1
      %s111 = scalar_select %p108, %s109, %s110
      %p114 = pneg %p108
      %p115 = scmp.eq.s32.totalorder %s29, 1
      %p116 = por %p114, %p115
      %p117 = scmp.ne.s32.totalorder %s109, %s112
      %p118 = scmp.eq.s32.totalorder %s29, 0
      %p119 = por %p117, %p118
      %p120 = scmp.ne.s32.totalorder %s109, %s112
      %p121 = scmp.eq.s32.totalorder %s34, 1
      %p122 = por %p120, %p121
      %p123 = scmp.ne.s32.totalorder %s112, %s113
      %p124 = scmp.eq.s32.totalorder %s34, 0
      %p125 = por %p123, %p124
      %p126 = scmp.ne.s32.totalorder %s112, %s113
      %p127 = scmp.eq.s32.totalorder %s35, 1
      %p128 = por %p126, %p127
      %p130 = scmp.ne.s32.totalorder %s113, %s129
      %p131 = scmp.eq.s32.totalorder %s35, 0
      %p132 = por %p130, %p131
      %s133 = ssub.s32 %s36, %s48
      %s134 = ssub.s32 %s37, %s44
      %s135 = sor.u32 %s133, %s134
      %p136 = scmp.eq.s32.totalorder %s135, 0
      %s138 = sadd.s32 %s137, 1
      %s139 = scalar_select %p136, %s137, %s138
      %p142 = pneg %p136
      %p143 = scmp.eq.s32.totalorder %s29, 1
      %p144 = por %p142, %p143
      %p145 = scmp.ne.s32.totalorder %s137, %s140
      %p146 = scmp.eq.s32.totalorder %s29, 0
      %p147 = por %p145, %p146
      %p148 = scmp.ne.s32.totalorder %s137, %s140
      %p149 = scmp.eq.s32.totalorder %s34, 1
      %p150 = por %p148, %p149
      %p151 = scmp.ne.s32.totalorder %s140, %s141
      %p152 = scmp.eq.s32.totalorder %s34, 0
      %p153 = por %p151, %p152
      %p154 = scmp.ne.s32.totalorder %s140, %s141
      %p155 = scmp.eq.s32.totalorder %s35, 1
      %p156 = por %p154, %p155
      %p158 = scmp.ne.s32.totalorder %s141, %s157
      %p159 = scmp.eq.s32.totalorder %s35, 0
      %p160 = por %p158, %p159
      %s161 = ssub.s32 %s36, %s48
      %s162 = ssub.s32 %s37, %s44
      %s163 = sor.u32 %s161, %s162
      %p164 = scmp.eq.s32.totalorder %s163, 0
      %s166 = sadd.s32 %s165, 1
      %s167 = scalar_select %p164, %s165, %s166
      %p170 = pneg %p164
      %p171 = scmp.eq.s32.totalorder %s29, 1
      %p172 = por %p170, %p171
      %p173 = scmp.ne.s32.totalorder %s165, %s168
      %p174 = scmp.eq.s32.totalorder %s29, 0
      %p175 = por %p173, %p174
      %p176 = scmp.ne.s32.totalorder %s165, %s168
      %p177 = scmp.eq.s32.totalorder %s34, 1
      %p178 = por %p176, %p177
      %p179 = scmp.ne.s32.totalorder %s168, %s169
      %p180 = scmp.eq.s32.totalorder %s34, 0
      %p181 = por %p179, %p180
      %p182 = scmp.ne.s32.totalorder %s168, %s169
      %p183 = scmp.eq.s32.totalorder %s35, 1
      %p184 = por %p182, %p183
      %p186 = scmp.ne.s32.totalorder %s169, %s185
      %p187 = scmp.eq.s32.totalorder %s35, 0
      %p188 = por %p186, %p187
      %s189 = ssub.s32 %s36, %s48
      %s190 = ssub.s32 %s37, %s44
      %s191 = sor.u32 %s189, %s190
      %p192 = scmp.eq.s32.totalorder %s191, 0
      %s194 = sadd.s32 %s193, 1
      %s195 = scalar_select %p192, %s193, %s194
      %p198 = pneg %p192
      %p199 = scmp.eq.s32.totalorder %s29, 1
      %p200 = por %p198, %p199
      %p201 = scmp.ne.s32.totalorder %s193, %s196
      %p202 = scmp.eq.s32.totalorder %s29, 0
      %p203 = por %p201, %p202
      %p204 = scmp.ne.s32.totalorder %s193, %s196
      %p205 = scmp.eq.s32.totalorder %s34, 1
      %p206 = por %p204, %p205
      %p207 = scmp.ne.s32.totalorder %s196, %s197
      %p208 = scmp.eq.s32.totalorder %s34, 0
      %p209 = por %p207, %p208
      %p210 = scmp.ne.s32.totalorder %s196, %s197
      %p211 = scmp.eq.s32.totalorder %s35, 1
      %p212 = por %p210, %p211
      %p214 = scmp.ne.s32.totalorder %s197, %s213
      %p215 = scmp.eq.s32.totalorder %s35, 0
      %p216 = por %p214, %p215
      %s217 = ssub.s32 %s36, %s48
      %s218 = ssub.s32 %s37, %s44
      %s219 = sor.u32 %s217, %s218
      %p220 = scmp.eq.s32.totalorder %s219, 0
      %s222 = sadd.s32 %s221, 1
      %s223 = scalar_select %p220, %s221, %s222
      %p226 = pneg %p220
      %p227 = scmp.eq.s32.totalorder %s29, 1
      %p228 = por %p226, %p227
      %p229 = scmp.ne.s32.totalorder %s221, %s224
      %p230 = scmp.eq.s32.totalorder %s29, 0
      %p231 = por %p229, %p230
      %p232 = scmp.ne.s32.totalorder %s221, %s224
      %p233 = scmp.eq.s32.totalorder %s34, 1
      %p234 = por %p232, %p233
      %p235 = scmp.ne.s32.totalorder %s224, %s225
      %p236 = scmp.eq.s32.totalorder %s34, 0
      %p237 = por %p235, %p236
      %p238 = scmp.ne.s32.totalorder %s224, %s225
      %p239 = scmp.eq.s32.totalorder %s35, 1
      %p240 = por %p238, %p239
      %p242 = scmp.ne.s32.totalorder %s225, %s241
      %p243 = scmp.eq.s32.totalorder %s35, 0
      %p244 = por %p242, %p243
      %s245 = ssub.s32 %s36, %s48
      %p246 = scmp.eq.s32.totalorder %s245, 0
      %s248 = sadd.s32 %s247, 1
      %s249 = scalar_select %p246, %s247, %s248
      %p252 = pneg %p246
      %p253 = scmp.eq.s32.totalorder %s29, 1
      %p254 = por %p252, %p253
      %p255 = scmp.ne.s32.totalorder %s247, %s250
      %p256 = scmp.eq.s32.totalorder %s29, 0
      %p257 = por %p255, %p256
      %p258 = scmp.ne.s32.totalorder %s247, %s250
      %p259 = scmp.eq.s32.totalorder %s34, 1
      %p260 = por %p258, %p259
      %p261 = scmp.ne.s32.totalorder %s250, %s251
      %p262 = scmp.eq.s32.totalorder %s34, 0
      %p263 = por %p261, %p262
      %p264 = scmp.ne.s32.totalorder %s250, %s251
      %p265 = scmp.eq.s32.totalorder %s35, 1
      %p266 = por %p264, %p265
      %p268 = scmp.ne.s32.totalorder %s251, %s267
      %p269 = scmp.eq.s32.totalorder %s35, 0
      %p270 = por %p268, %p269
      %p271 = scmp.le.s32.totalorder 1, %s29
      %p272 = scmp.lt.s32.totalorder %s29, 3
      %p273 = pnand %p271, %p272
      %p274 = pneg %p273
      // Predicated region
      $region9: #{tpu_custom_call.1} parent=5 // pred_check
        _
      $region10: #{tpu_custom_call.1} parent=5 // pred_check_branch
        %276 = sbr.rel (%p273) target = $region12
      $region11: #{tpu_custom_call.1} parent=5 // pred_region
        %s277 = ssub.s32 %s29, 1
      $region12: #{tpu_custom_call.1} parent=5 // pred_fallthru
        _
      %p278 = scmp.lt.s32.totalorder %s29, 2
      // Predicated region
      $region13: #{tpu_custom_call.1} parent=5 // pred_check
        %p279 = pneg %p278
      $region14: #{tpu_custom_call.1} parent=5 // pred_check_branch
        %281 = sbr.rel (%p279) target = $region16
      $region15: #{tpu_custom_call.1} parent=5 // pred_region
        // Predicated region
        $region17: #{tpu_custom_call.1} parent=15 // pred_check
          %p282 = pneg %p63
        $region18: #{tpu_custom_call.1} parent=15 // pred_check_branch
          %284 = sbr.rel (%p282) target = $region20
        $region19: #{tpu_custom_call.1} parent=15 // pred_region
          %s285 = sand.u32 %s53, 1
          %s286 = scalar_lea.sflag [#allocation3], %s285
          %s287 = sand.u32 %s53, 1
          %s288 = smul.addr %s287, 32
          %s289 = scalar_lea.vmem [#allocation2], %s288
          %s290 = smul.u32 2, %s36
          %s291 = smul.u32 4, %s37
          %s293 = ssub.s32 512, 512
          %294 = vsyncadd %s286, %s293
          %s295 = smul.addr %s290, 8
          %s296 = sadd.s32 %s291, %s295
          %s297 = smul.addr %s296, 64
          %s298 = scalar_lea.hbm %s0, %s297
          %s299 = sshll.u32 %s289, 4
          %s300 = int_to_ptr.vmem [resolvable:$true] %s299
          %305 = dma.hbm_to_vmem [thread:$0]  %s298, 512, %s300, %s286, 512, 256, 16
        $region20: #{tpu_custom_call.1} parent=15 // pred_fallthru
          _
        // Predicated region
        $region21: #{tpu_custom_call.1} parent=15 // pred_check
          %p306 = pneg %p91
        $region22: #{tpu_custom_call.1} parent=15 // pred_check_branch
          %308 = sbr.rel (%p306) target = $region24
        $region23: #{tpu_custom_call.1} parent=15 // pred_region
          %s309 = sand.u32 %s29, 1
          %s310 = scalar_lea.sflag [#allocation6], %s309
          %s311 = sand.u32 %s81, 1
          %s312 = smul.addr %s311, 64
          %s313 = scalar_lea.vmem [#allocation5], %s312
          %s314 = smul.u32 2, %s36
          %s315 = smul.u32 4, %s37
          %s317 = ssub.s32 1024, 1024
          %318 = vsyncadd %s310, %s317
          %s319 = smul.addr %s314, 8
          %s320 = sadd.s32 %s315, %s319
          %s321 = smul.addr %s320, 128
          %s322 = scalar_lea.hbm %s1, %s321
          %s323 = sshll.u32 %s313, 4
          %s324 = int_to_ptr.vmem [resolvable:$true] %s323
          %329 = dma.hbm_to_vmem [thread:$0]  %s322, 1024, %s324, %s310, 1024, 512, 32
        $region24: #{tpu_custom_call.1} parent=15 // pred_fallthru
          _
        // Predicated region
        $region25: #{tpu_custom_call.1} parent=15 // pred_check
          %p330 = pneg %p119
        $region26: #{tpu_custom_call.1} parent=15 // pred_check_branch
          %332 = sbr.rel (%p330) target = $region28
        $region27: #{tpu_custom_call.1} parent=15 // pred_region
          %s333 = sand.u32 %s29, 1
          %s334 = scalar_lea.sflag [#allocation6], %s333
          %s335 = sand.u32 %s109, 1
          %s336 = smul.addr %s335, 32
          %s337 = scalar_lea.vmem [#allocation7], %s336
          %s338 = smul.u32 2, %s36
          %s339 = smul.u32 4, %s37
          %s341 = ssub.s32 512, 512
          %342 = vsyncadd %s334, %s341
          %s343 = smul.addr %s338, 8
          %s344 = sadd.s32 %s339, %s343
          %s345 = smul.addr %s344, 64
          %s346 = scalar_lea.hbm %s2, %s345
          %s347 = sshll.u32 %s337, 4
          %s348 = int_to_ptr.vmem [resolvable:$true] %s347
          %353 = dma.hbm_to_vmem [thread:$0]  %s346, 512, %s348, %s334, 512, 256, 16
        $region28: #{tpu_custom_call.1} parent=15 // pred_fallthru
          _
        // Predicated region
        $region29: #{tpu_custom_call.1} parent=15 // pred_check
          %p354 = pneg %p147
        $region30: #{tpu_custom_call.1} parent=15 // pred_check_branch
          %356 = sbr.rel (%p354) target = $region32
        $region31: #{tpu_custom_call.1} parent=15 // pred_region
          %s357 = sand.u32 %s29, 1
          %s358 = scalar_lea.sflag [#allocation9], %s357
          %s359 = sand.u32 %s137, 1
          %s360 = smul.addr %s359, 64
          %s361 = scalar_lea.vmem [#allocation8], %s360
          %s362 = smul.u32 2, %s36
          %s363 = smul.u32 4, %s37
          %s365 = ssub.s32 1024, 1024
          %366 = vsyncadd %s358, %s365
          %s367 = smul.addr %s362, 8
          %s368 = sadd.s32 %s363, %s367
          %s369 = smul.addr %s368, 128
          %s370 = scalar_lea.hbm %s3, %s369
          %s371 = sshll.u32 %s361, 4
          %s372 = int_to_ptr.vmem [resolvable:$true] %s371
          %377 = dma.hbm_to_vmem [thread:$0]  %s370, 1024, %s372, %s358, 1024, 512, 32
        $region32: #{tpu_custom_call.1} parent=15 // pred_fallthru
          _
        // Predicated region
        $region33: #{tpu_custom_call.1} parent=15 // pred_check
          %p378 = pneg %p175
        $region34: #{tpu_custom_call.1} parent=15 // pred_check_branch
          %380 = sbr.rel (%p378) target = $region36
        $region35: #{tpu_custom_call.1} parent=15 // pred_region
          %s381 = sand.u32 %s29, 1
          %s382 = scalar_lea.sflag [#allocation9], %s381
          %s383 = sand.u32 %s165, 1
          %s384 = smul.addr %s383, 8
          %s385 = scalar_lea.vmem [#allocation10], %s384
          %s386 = smul.u32 4, %s37
          %s388 = ssub.s32 128, 128
          %389 = vsyncadd %s382, %s388
          %s390 = smul.addr %s36, 8
          %s391 = sadd.s32 %s386, %s390
          %s392 = smul.addr %s391, 32
          %s393 = scalar_lea.hbm %s4, %s392
          %s395 = sshll.u32 %s385, 4
          %s396 = int_to_ptr.vmem [resolvable:$true] %s395
          %398 = dma.hbm_to_vmem [thread:$0]  %s393, 128, %s396, %s382
        $region36: #{tpu_custom_call.1} parent=15 // pred_fallthru
          _
      $region16: #{tpu_custom_call.1} parent=5 // pred_fallthru
        _
      %p399 = scmp.le.s32.totalorder 1, %s29
      %p400 = scmp.lt.s32.totalorder %s29, 3
      %p401 = pnand %p399, %p400
      %p402 = pneg %p401
      // Predicated region
      $region37: #{tpu_custom_call.1} parent=5 // pred_check
        _
      $region38: #{tpu_custom_call.1} parent=5 // pred_check_branch
        %404 = sbr.rel (%p401) target = $region40
      $region39: #{tpu_custom_call.1} parent=5 // pred_region
        %s405 = ssub.s32 %s29, 1
        %s406 = sand.u32 %s56, 1
        %s407 = scalar_lea.sflag [#allocation3], %s406
        %s408 = sand.u32 %s56, 1
        %s409 = smul.addr %s408, 32
        %s410 = scalar_lea.vmem [#allocation2], %s409
        // Predicated region
        $region41: #{tpu_custom_call.1} parent=39 // pred_check
          %p411 = pneg %p69
        $region42: #{tpu_custom_call.1} parent=39 // pred_check_branch
          %413 = sbr.rel (%p411) target = $region44
        $region43: #{tpu_custom_call.1} parent=39 // pred_region
          %414 = dma.done %s407, 512
        $region44: #{tpu_custom_call.1} parent=39 // pred_fallthru
          _
        %s415 = sand.u32 %s34, 1
        %s416 = scalar_lea.sflag [#allocation6], %s415
        %s417 = sand.u32 %s84, 1
        %s418 = smul.addr %s417, 64
        %s419 = scalar_lea.vmem [#allocation5], %s418
        // Predicated region
        $region45: #{tpu_custom_call.1} parent=39 // pred_check
          %p420 = pneg %p97
        $region46: #{tpu_custom_call.1} parent=39 // pred_check_branch
          %422 = sbr.rel (%p420) target = $region48
        $region47: #{tpu_custom_call.1} parent=39 // pred_region
          %423 = dma.done %s416, 1024
        $region48: #{tpu_custom_call.1} parent=39 // pred_fallthru
          _
        %s424 = sand.u32 %s34, 1
        %s425 = scalar_lea.sflag [#allocation6], %s424
        %s426 = sand.u32 %s112, 1
        %s427 = smul.addr %s426, 32
        %s428 = scalar_lea.vmem [#allocation7], %s427
        // Predicated region
        $region49: #{tpu_custom_call.1} parent=39 // pred_check
          %p429 = pneg %p125
        $region50: #{tpu_custom_call.1} parent=39 // pred_check_branch
          %431 = sbr.rel (%p429) target = $region52
        $region51: #{tpu_custom_call.1} parent=39 // pred_region
          %432 = dma.done %s425, 512
        $region52: #{tpu_custom_call.1} parent=39 // pred_fallthru
          _
        %s433 = sand.u32 %s34, 1
        %s434 = scalar_lea.sflag [#allocation9], %s433
        %s435 = sand.u32 %s140, 1
        %s436 = smul.addr %s435, 64
        %s437 = scalar_lea.vmem [#allocation8], %s436
        // Predicated region
        $region53: #{tpu_custom_call.1} parent=39 // pred_check
          %p438 = pneg %p153
        $region54: #{tpu_custom_call.1} parent=39 // pred_check_branch
          %440 = sbr.rel (%p438) target = $region56
        $region55: #{tpu_custom_call.1} parent=39 // pred_region
          %441 = dma.done %s434, 1024
        $region56: #{tpu_custom_call.1} parent=39 // pred_fallthru
          _
        %s442 = sand.u32 %s34, 1
        %s443 = scalar_lea.sflag [#allocation9], %s442
        %s444 = sand.u32 %s168, 1
        %s445 = smul.addr %s444, 8
        %s446 = scalar_lea.vmem [#allocation10], %s445
        // Predicated region
        $region57: #{tpu_custom_call.1} parent=39 // pred_check
          %p447 = pneg %p181
        $region58: #{tpu_custom_call.1} parent=39 // pred_check_branch
          %449 = sbr.rel (%p447) target = $region60
        $region59: #{tpu_custom_call.1} parent=39 // pred_region
          %450 = dma.done %s443, 128
        $region60: #{tpu_custom_call.1} parent=39 // pred_fallthru
          _
        %s451 = sand.u32 %s56, 1
        %s452 = scalar_lea.sflag [#allocation3], %s451
        %s453 = sand.u32 %s56, 1
        %s454 = smul.addr %s453, 32
        %s455 = scalar_lea.vmem [#allocation2], %s454
        %p456 = pneg %p69
        %p457 = pneg %p66
        %s458 = sand.u32 %s34, 1
        %s459 = scalar_lea.sflag [#allocation6], %s458
        %s460 = sand.u32 %s84, 1
        %s461 = smul.addr %s460, 64
        %s462 = scalar_lea.vmem [#allocation5], %s461
        %p463 = pneg %p97
        %p464 = pneg %p94
        %s465 = sand.u32 %s34, 1
        %s466 = scalar_lea.sflag [#allocation6], %s465
        %s467 = sand.u32 %s112, 1
        %s468 = smul.addr %s467, 32
        %s469 = scalar_lea.vmem [#allocation7], %s468
        %p470 = pneg %p125
        %p471 = pneg %p122
        %s472 = sand.u32 %s34, 1
        %s473 = scalar_lea.sflag [#allocation9], %s472
        %s474 = sand.u32 %s140, 1
        %s475 = smul.addr %s474, 64
        %s476 = scalar_lea.vmem [#allocation8], %s475
        %p477 = pneg %p153
        %p478 = pneg %p150
        %s479 = sand.u32 %s34, 1
        %s480 = scalar_lea.sflag [#allocation9], %s479
        %s481 = sand.u32 %s168, 1
        %s482 = smul.addr %s481, 8
        %s483 = scalar_lea.vmem [#allocation10], %s482
        %p484 = pneg %p181
        %p485 = pneg %p178
        %p486 = pneg %p209
        %p487 = pneg %p206
        %s488 = sand.u32 %s196, 1
        %s489 = scalar_lea.sflag [#allocation4], %s488
        %s490 = sand.u32 %s196, 1
        %s491 = smul.addr %s490, 8
        %s492 = scalar_lea.vmem [#allocation11], %s491
        %p493 = pneg %p237
        %p494 = pneg %p234
        %s495 = sand.u32 %s34, 1
        %s496 = scalar_lea.sflag [#allocation13], %s495
        %s497 = sand.u32 %s224, 1
        %s498 = smul.addr %s497, 8
        %s499 = scalar_lea.vmem [#allocation12], %s498
        %p500 = pneg %p263
        %p501 = pneg %p260
        %s502 = smul.u32 2, %s38
        %s503 = smul.u32 4, %s39
        %s504 = smul.u32 2, %s38
        %s505 = smul.u32 4, %s39
        %s506 = smul.u32 2, %s38
        %s507 = smul.u32 4, %s39
        %s508 = smul.u32 2, %s38
        %s509 = smul.u32 4, %s39
        %s510 = smul.u32 4, %s39
        %s511 = smul.u32 4, %s39
        %s512 = smul.u32 4, %s39
        %p513 = scmp.eq.s32.totalorder %s39, 0
        // Predicated region
        $region61: #{tpu_custom_call.1} parent=39 // pred_check
          %p514 = pneg %p513
        $region62: #{tpu_custom_call.1} parent=39 // pred_check_branch
          %516 = sbr.rel (%p514) target = $region64
        $region63: #{tpu_custom_call.1} parent=39 // pred_region
          %vm517 = vcmask 58368
          %518 = vst.msk [vmem:[#allocation14] sm:$0x3] %vm517, 0.0
        $region64: #{tpu_custom_call.1} parent=39 // pred_fallthru
          _
        %v519 = vlaneseq
        %v520 = vand.u32 %v519, 127
        %v521 = vld [vmem:[%s410] sm:$0xff]
        %v522 = vld [vmem:[%s410 + $0x8] sm:$0xff]
        %v523 = vld [vmem:[%s428] sm:$0xff]
        %v524 = vld [vmem:[%s428 + $0x8] sm:$0xff]
        %v525 = vld [vmem:[%s419] sm:$0xff]
        %v526 = vld [vmem:[%s419 + $0x8] sm:$0xff]
        %v527 = vld [vmem:[%s419 + $0x10] sm:$0xff]
        %v528 = vld [vmem:[%s419 + $0x18] sm:$0xff]
        %v529 = vld [vmem:[%s437] sm:$0xff]
        %v530 = vld [vmem:[%s437 + $0x8] sm:$0xff]
        %v531 = vld [vmem:[%s437 + $0x10] sm:$0xff]
        %v532 = vld [vmem:[%s437 + $0x18] sm:$0xff]
        %v533 = vld [vmem:[%s446] ss:$2 sm:$0xf]
        %v534 = vrot.slane %v529, 4
        %v535 = vmax.f32 %v529, %v534
        %v536 = vrot.slane %v535, 2
        %v537 = vmax.f32 %v535, %v536
        %v538 = vrot.slane %v537, 1
        %v539 = vmax.f32 %v537, %v538
        %v540 = vrot.slane %v530, 4
        %v541 = vmax.f32 %v530, %v540
        %v542 = vrot.slane %v541, 2
        %v543 = vmax.f32 %v541, %v542
        %v544 = vrot.slane %v543, 1
        %v545 = vmax.f32 %v543, %v544
        %v546 = vrot.slane %v531, 4
        %v547 = vmax.f32 %v531, %v546
        %v548 = vrot.slane %v547, 2
        %v549 = vmax.f32 %v547, %v548
        %v550 = vrot.slane %v549, 1
        %v551 = vmax.f32 %v549, %v550
        %v552 = vrot.slane %v532, 4
        %v553 = vmax.f32 %v532, %v552
        %v554 = vrot.slane %v553, 2
        %v555 = vmax.f32 %v553, %v554
        %v556 = vrot.slane %v555, 1
        %v557 = vmax.f32 %v555, %v556
        %v558 = vsub.f32 %v529, %v539
        %v559 = vsub.f32 %v530, %v545
        %v560 = vsub.f32 %v531, %v551
        %v561 = vsub.f32 %v532, %v557
        %v562 = vmul.f32 %v558, 1.442695
        %v563 = vpow.pop %v562
        %v564 = vmul.f32 %v559, 1.442695
        %v565 = vpow.pop %v564
        %v566 = vmul.f32 %v560, 1.442695
        %v567 = vpow.pop %v566
        %v568 = vmul.f32 %v561, 1.442695
        %v569 = vpow.pop %v568
        %v570 = vrot.slane %v563, 4
        %v571 = vadd.f32 %v563, %v570
        %v572 = vrot.slane %v571, 2
        %v573 = vadd.f32 %v571, %v572
        %v574 = vrot.slane %v573, 1
        %v575 = vadd.f32 %v573, %v574
        %v576 = vrot.slane %v565, 4
        %v577 = vadd.f32 %v565, %v576
        %v578 = vrot.slane %v577, 2
        %v579 = vadd.f32 %v577, %v578
        %v580 = vrot.slane %v579, 1
        %v581 = vadd.f32 %v579, %v580
        %v582 = vrot.slane %v567, 4
        %v583 = vadd.f32 %v567, %v582
        %v584 = vrot.slane %v583, 2
        %v585 = vadd.f32 %v583, %v584
        %v586 = vrot.slane %v585, 1
        %v587 = vadd.f32 %v585, %v586
        %v588 = vrot.slane %v569, 4
        %v589 = vadd.f32 %v569, %v588
        %v590 = vrot.slane %v589, 2
        %v591 = vadd.f32 %v589, %v590
        %v592 = vrot.slane %v591, 1
        %v593 = vadd.f32 %v591, %v592
        %v594 = vlog2.pop %v575
        %v595 = vmul.f32 %v594, 0.6931472
        %v596 = vlog2.pop %v581
        %v597 = vmul.f32 %v596, 0.6931472
        %v598 = vlog2.pop %v587
        %v599 = vmul.f32 %v598, 0.6931472
        %v600 = vlog2.pop %v593
        %v601 = vmul.f32 %v600, 0.6931472
        %v602 = vadd.f32 %v539, %v595
        %v603 = vadd.f32 %v545, %v597
        %v604 = vadd.f32 %v551, %v599
        %v605 = vadd.f32 %v557, %v601
        %v606 = vsub.f32 %v529, %v602
        %v607 = vsub.f32 %v530, %v603
        %v608 = vsub.f32 %v531, %v604
        %v609 = vsub.f32 %v532, %v605
        %v610 = vmax.f32 %v606, -16.118095
        %v611 = vmax.f32 %v607, -16.118095
        %v612 = vmax.f32 %v608, -16.118095
        %v613 = vmax.f32 %v609, -16.118095
        %v614 = vmul.f32 %v525, %v610
        %v615 = vmul.f32 %v526, %v611
        %v616 = vmul.f32 %v527, %v612
        %v617 = vmul.f32 %v528, %v613
        %v618 = vrot.slane %v614, 4
        %v619 = vadd.f32 %v614, %v618
        %v620 = vrot.slane %v619, 2
        %v621 = vadd.f32 %v619, %v620
        %v622 = vrot.slane %v621, 1
        %v623 = vadd.f32 %v621, %v622
        %v624 = vrot.slane %v615, 4
        %v625 = vadd.f32 %v615, %v624
        %v626 = vrot.slane %v625, 2
        %v627 = vadd.f32 %v625, %v626
        %v628 = vrot.slane %v627, 1
        %v629 = vadd.f32 %v627, %v628
        %v630 = vrot.slane %v616, 4
        %v631 = vadd.f32 %v616, %v630
        %v632 = vrot.slane %v631, 2
        %v633 = vadd.f32 %v631, %v632
        %v634 = vrot.slane %v633, 1
        %v635 = vadd.f32 %v633, %v634
        %v636 = vrot.slane %v617, 4
        %v637 = vadd.f32 %v617, %v636
        %v638 = vrot.slane %v637, 2
        %v639 = vadd.f32 %v637, %v638
        %v640 = vrot.slane %v639, 1
        %v641 = vadd.f32 %v639, %v640
        %v642 = vsub.f32 0.0, %v623
        %v643 = vsub.f32 0.0, %v629
        %v644 = vsub.f32 0.0, %v635
        %v645 = vsub.f32 0.0, %v641
        %v646 = vsub.f32 %v521, %v523
        %v647 = vsub.f32 %v522, %v524
        %v648 = vand.u32 2147483647, %v646
        %v649 = vand.u32 2147483647, %v647
        %vm650 = vcmp.lt.f32.partialorder %v648, 1.0
        %vm651 = vcmp.lt.f32.partialorder %v649, 1.0
        %v652 = vmul.f32 %v646, 0.5
        %v653 = vmul.f32 %v647, 0.5
        %v654 = vmul.f32 %v652, %v646
        %v655 = vmul.f32 %v653, %v647
        %v656 = vsub.f32 %v648, 0.5
        %v657 = vsub.f32 %v649, 0.5
        %v658 = vsel %vm650, %v654, %v656
        %v659 = vsel %vm651, %v655, %v657
        %v662 = vcombine.high %v658, %v658
        %v663 = vcombine.high %v659, %v659
        %vm666 = vcmask 1043456
        %v667 = vsel %vm666, %v658, 0.0
        %v668 = vrot.slane %v667, 4
        %v669 = vadd.f32 %v667, %v668
        %v670 = vrot.slane %v669, 2
        %v671 = vadd.f32 %v669, %v670
        %v672 = vrot.slane %v671, 1
        %v673 = vadd.f32 %v671, %v672
        %v674 = vsel %vm666, %v662, 0.0
        %v675 = vrot.slane %v674, 4
        %v676 = vadd.f32 %v674, %v675
        %v677 = vrot.slane %v676, 2
        %v678 = vadd.f32 %v676, %v677
        %v679 = vrot.slane %v678, 1
        %v680 = vadd.f32 %v678, %v679
        %v681 = vsel %vm666, %v659, 0.0
        %v682 = vrot.slane %v681, 4
        %v683 = vadd.f32 %v681, %v682
        %v684 = vrot.slane %v683, 2
        %v685 = vadd.f32 %v683, %v684
        %v686 = vrot.slane %v685, 1
        %v687 = vadd.f32 %v685, %v686
        %v688 = vsel %vm666, %v663, 0.0
        %v689 = vrot.slane %v688, 4
        %v690 = vadd.f32 %v688, %v689
        %v691 = vrot.slane %v690, 2
        %v692 = vadd.f32 %v690, %v691
        %v693 = vrot.slane %v692, 1
        %v694 = vadd.f32 %v692, %v693
        %v695 = vrcp.pop %v575
        %v696 = vmul.f32 %v563, %v695
        %v697 = vrcp.pop %v581
        %v698 = vmul.f32 %v565, %v697
        %v699 = vrcp.pop %v587
        %v700 = vmul.f32 %v567, %v699
        %v701 = vrcp.pop %v593
        %v702 = vmul.f32 %v569, %v701
        %v703 = vsub.f32 1.0, %v696
        %v704 = vsub.f32 1.0, %v698
        %v705 = vsub.f32 1.0, %v700
        %v706 = vsub.f32 1.0, %v702
        %v707 = vsub.f32 1.0, %v533
        %v709 = vlaneseq
        %v710 = vshrl.u32 %v709, 7
        %v711 = vsub.s32 0, %v710
        %v712 = vrot.slane %v707, %v711
        %v713 = vlaneseq
        %v714 = vshrl.u32 %v713, 7
        %v715 = vsub.s32 1, %v714
        %v716 = vrot.slane %v707, %v715
        %v717 = vlaneseq
        %v718 = vshrl.u32 %v717, 7
        %v719 = vsub.s32 2, %v718
        %v720 = vrot.slane %v707, %v719
        %v721 = vlaneseq
        %v722 = vshrl.u32 %v721, 7
        %v723 = vsub.s32 3, %v722
        %v724 = vrot.slane %v707, %v723
        %v729 = vmul.f32 %v703, %v712
        %v730 = vmul.f32 %v704, %v716
        %v731 = vmul.f32 %v705, %v720
        %v732 = vmul.f32 %v706, %v724
        %v737 = vcombine.low %v642, %v643
        %v738 = vcombine.low %v644, %v645
        %v740 = vunpack.c.l.s4 1966171168
        %v741 = vunpack.c.0.s8 %v740
        %v742 = vlaneseq
        %v743 = vshrl.u32 %v742, 7
        %v744 = vsub.s32 %v741, %v743
        %v745 = vrot.slane %v737, %v744
        %v747 = vunpack.c.l.s4 1966171168
        %v748 = vunpack.c.0.s8 %v747
        %v749 = vlaneseq
        %v750 = vshrl.u32 %v749, 7
        %v751 = vsub.s32 %v748, %v750
        %v752 = vrot.slane %v738, %v751
        %v753 = vcombine.low %v745, %v752
        %v755 = vunpack.c.l.s4 1966171168
        %v756 = vunpack.c.0.s8 %v755
        %v757 = vlaneseq
        %v758 = vshrl.u32 %v757, 7
        %v759 = vsub.s32 %v756, %v758
        %v760 = vrot.slane %v753, %v759
        %v762 = vlaneseq
        %vm763 = vcmp.ge.s32.totalorder %v762, 0
        %vm764 = vcmp.lt.s32.totalorder %v762, 512
        %vm765 = vmand %vm763, %vm764
        %766 = vst.msk [vmem:[%s492] ss:$2 sm:$0xf] %vm765, %v760
        %v771 = vcombine.low %v729, %v730
        %v772 = vcombine.low %v731, %v732
        %v774 = vunpack.c.l.s4 1966171168
        %v775 = vunpack.c.0.s8 %v774
        %v776 = vlaneseq
        %v777 = vshrl.u32 %v776, 7
        %v778 = vsub.s32 %v775, %v777
        %v779 = vrot.slane %v771, %v778
        %v781 = vunpack.c.l.s4 1966171168
        %v782 = vunpack.c.0.s8 %v781
        %v783 = vlaneseq
        %v784 = vshrl.u32 %v783, 7
        %v785 = vsub.s32 %v782, %v784
        %v786 = vrot.slane %v772, %v785
        %v787 = vcombine.low %v779, %v786
        %v789 = vunpack.c.l.s4 1966171168
        %v790 = vunpack.c.0.s8 %v789
        %v791 = vlaneseq
        %v792 = vshrl.u32 %v791, 7
        %v793 = vsub.s32 %v790, %v792
        %v794 = vrot.slane %v787, %v793
        %796 = vst.msk [vmem:[%s499] ss:$2 sm:$0xf] %vm765, %v794
        %v798 = vlaneseq
        %v799 = vshrl.u32 %v798, 7
        %v800 = vsub.s32 0, %v799
        %v801 = vrot.slane %v533, %v800
        %v802 = vlaneseq
        %v803 = vshrl.u32 %v802, 7
        %v804 = vsub.s32 1, %v803
        %v805 = vrot.slane %v533, %v804
        %v806 = vlaneseq
        %v807 = vshrl.u32 %v806, 7
        %v808 = vsub.s32 2, %v807
        %v809 = vrot.slane %v533, %v808
        %v810 = vlaneseq
        %v811 = vshrl.u32 %v810, 7
        %v812 = vsub.s32 3, %v811
        %v813 = vrot.slane %v533, %v812
        %v818 = vmul.f32 %v642, %v801
        %v819 = vmul.f32 %v643, %v805
        %v820 = vmul.f32 %v644, %v809
        %v821 = vmul.f32 %v645, %v813
        %vm822 = vcmask 1040384
        %v823 = vsel %vm822, %v818, 0.0
        %v824 = vsel %vm822, %v819, 0.0
        %v825 = vadd.f32 %v823, %v824
        %v826 = vsel %vm822, %v820, 0.0
        %v827 = vadd.f32 %v825, %v826
        %v828 = vsel %vm822, %v821, 0.0
        %v829 = vadd.f32 %v827, %v828
        %830 = vadd.xlane.f32.xlu0 %v829
        %v831 = vpop.xlane.xlu0 %830
        %v832 = vmul.f32 %v673, %v801
        %v833 = vmul.f32 %v680, %v805
        %v834 = vmul.f32 %v687, %v809
        %v835 = vmul.f32 %v694, %v813
        %v836 = vsel %vm822, %v832, 0.0
        %v837 = vsel %vm822, %v833, 0.0
        %v838 = vadd.f32 %v836, %v837
        %v839 = vsel %vm822, %v834, 0.0
        %v840 = vadd.f32 %v838, %v839
        %v841 = vsel %vm822, %v835, 0.0
        %v842 = vadd.f32 %v840, %v841
        %843 = vadd.xlane.f32.xlu0 %v842
        %v844 = vpop.xlane.xlu0 %843
        %v845 = vsel %vm822, %v801, 0.0
        %v846 = vsel %vm822, %v805, 0.0
        %v847 = vadd.f32 %v845, %v846
        %v848 = vsel %vm822, %v809, 0.0
        %v849 = vadd.f32 %v847, %v848
        %v850 = vsel %vm822, %v813, 0.0
        %v851 = vadd.f32 %v849, %v850
        %852 = vadd.xlane.f32.xlu0 %v851
        %v853 = vpop.xlane.xlu0 %852
        %vm854 = vcmp.eq.s32.totalorder %v520, 0
        %v855 = vsel %vm854, %v831, 0.0
        %vm856 = vcmp.eq.s32.totalorder %v520, 1
        %v857 = vsel %vm856, %v844, 0.0
        %v858 = vadd.f32 %v855, %v857
        %vm859 = vcmp.eq.s32.totalorder %v520, 2
        %v860 = vsel %vm859, %v853, 0.0
        %v861 = vadd.f32 %v858, %v860
        %v862 = vld [vmem:[#allocation14] sm:$0x1]
        %v863 = vadd.f32 %v862, %v861
        %vm864 = vcmask 57344
        %865 = vst.msk [vmem:[#allocation14] sm:$0x1] %vm864, %v863
        %s866 = scalar_lea.vmem %s410, 16 [#allocation2]
        %v867 = vld [vmem:[%s866] sm:$0xff]
        %v868 = vld [vmem:[%s866 + $0x8] sm:$0xff]
        %s869 = scalar_lea.vmem %s428, 16 [#allocation7]
        %v870 = vld [vmem:[%s869] sm:$0xff]
        %v871 = vld [vmem:[%s869 + $0x8] sm:$0xff]
        %s872 = scalar_lea.vmem %s419, 32 [#allocation5]
        %v873 = vld [vmem:[%s872] sm:$0xff]
        %v874 = vld [vmem:[%s872 + $0x8] sm:$0xff]
        %v875 = vld [vmem:[%s872 + $0x10] sm:$0xff]
        %v876 = vld [vmem:[%s872 + $0x18] sm:$0xff]
        %s877 = scalar_lea.vmem %s437, 32 [#allocation8]
        %v878 = vld [vmem:[%s877] sm:$0xff]
        %v879 = vld [vmem:[%s877 + $0x8] sm:$0xff]
        %v880 = vld [vmem:[%s877 + $0x10] sm:$0xff]
        %v881 = vld [vmem:[%s877 + $0x18] sm:$0xff]
        %s882 = scalar_lea.vmem %s446, 1 [#allocation10]
        %v883 = vld [vmem:[%s882] ss:$2 sm:$0xf]
        %v884 = vrot.slane %v878, 4
        %v885 = vmax.f32 %v878, %v884
        %v886 = vrot.slane %v885, 2
        %v887 = vmax.f32 %v885, %v886
        %v888 = vrot.slane %v887, 1
        %v889 = vmax.f32 %v887, %v888
        %v890 = vrot.slane %v879, 4
        %v891 = vmax.f32 %v879, %v890
        %v892 = vrot.slane %v891, 2
        %v893 = vmax.f32 %v891, %v892
        %v894 = vrot.slane %v893, 1
        %v895 = vmax.f32 %v893, %v894
        %v896 = vrot.slane %v880, 4
        %v897 = vmax.f32 %v880, %v896
        %v898 = vrot.slane %v897, 2
        %v899 = vmax.f32 %v897, %v898
        %v900 = vrot.slane %v899, 1
        %v901 = vmax.f32 %v899, %v900
        %v902 = vrot.slane %v881, 4
        %v903 = vmax.f32 %v881, %v902
        %v904 = vrot.slane %v903, 2
        %v905 = vmax.f32 %v903, %v904
        %v906 = vrot.slane %v905, 1
        %v907 = vmax.f32 %v905, %v906
        %v908 = vsub.f32 %v878, %v889
        %v909 = vsub.f32 %v879, %v895
        %v910 = vsub.f32 %v880, %v901
        %v911 = vsub.f32 %v881, %v907
        %v912 = vmul.f32 %v908, 1.442695
        %v913 = vpow.pop %v912
        %v914 = vmul.f32 %v909, 1.442695
        %v915 = vpow.pop %v914
        %v916 = vmul.f32 %v910, 1.442695
        %v917 = vpow.pop %v916
        %v918 = vmul.f32 %v911, 1.442695
        %v919 = vpow.pop %v918
        %v920 = vrot.slane %v913, 4
        %v921 = vadd.f32 %v913, %v920
        %v922 = vrot.slane %v921, 2
        %v923 = vadd.f32 %v921, %v922
        %v924 = vrot.slane %v923, 1
        %v925 = vadd.f32 %v923, %v924
        %v926 = vrot.slane %v915, 4
        %v927 = vadd.f32 %v915, %v926
        %v928 = vrot.slane %v927, 2
        %v929 = vadd.f32 %v927, %v928
        %v930 = vrot.slane %v929, 1
        %v931 = vadd.f32 %v929, %v930
        %v932 = vrot.slane %v917, 4
        %v933 = vadd.f32 %v917, %v932
        %v934 = vrot.slane %v933, 2
        %v935 = vadd.f32 %v933, %v934
        %v936 = vrot.slane %v935, 1
        %v937 = vadd.f32 %v935, %v936
        %v938 = vrot.slane %v919, 4
        %v939 = vadd.f32 %v919, %v938
        %v940 = vrot.slane %v939, 2
        %v941 = vadd.f32 %v939, %v940
        %v942 = vrot.slane %v941, 1
        %v943 = vadd.f32 %v941, %v942
        %v944 = vlog2.pop %v925
        %v945 = vmul.f32 %v944, 0.6931472
        %v946 = vlog2.pop %v931
        %v947 = vmul.f32 %v946, 0.6931472
        %v948 = vlog2.pop %v937
        %v949 = vmul.f32 %v948, 0.6931472
        %v950 = vlog2.pop %v943
        %v951 = vmul.f32 %v950, 0.6931472
        %v952 = vadd.f32 %v889, %v945
        %v953 = vadd.f32 %v895, %v947
        %v954 = vadd.f32 %v901, %v949
        %v955 = vadd.f32 %v907, %v951
        %v956 = vsub.f32 %v878, %v952
        %v957 = vsub.f32 %v879, %v953
        %v958 = vsub.f32 %v880, %v954
        %v959 = vsub.f32 %v881, %v955
        %v960 = vmax.f32 %v956, -16.118095
        %v961 = vmax.f32 %v957, -16.118095
        %v962 = vmax.f32 %v958, -16.118095
        %v963 = vmax.f32 %v959, -16.118095
        %v964 = vmul.f32 %v873, %v960
        %v965 = vmul.f32 %v874, %v961
        %v966 = vmul.f32 %v875, %v962
        %v967 = vmul.f32 %v876, %v963
        %v968 = vrot.slane %v964, 4
        %v969 = vadd.f32 %v964, %v968
        %v970 = vrot.slane %v969, 2
        %v971 = vadd.f32 %v969, %v970
        %v972 = vrot.slane %v971, 1
        %v973 = vadd.f32 %v971, %v972
        %v974 = vrot.slane %v965, 4
        %v975 = vadd.f32 %v965, %v974
        %v976 = vrot.slane %v975, 2
        %v977 = vadd.f32 %v975, %v976
        %v978 = vrot.slane %v977, 1
        %v979 = vadd.f32 %v977, %v978
        %v980 = vrot.slane %v966, 4
        %v981 = vadd.f32 %v966, %v980
        %v982 = vrot.slane %v981, 2
        %v983 = vadd.f32 %v981, %v982
        %v984 = vrot.slane %v983, 1
        %v985 = vadd.f32 %v983, %v984
        %v986 = vrot.slane %v967, 4
        %v987 = vadd.f32 %v967, %v986
        %v988 = vrot.slane %v987, 2
        %v989 = vadd.f32 %v987, %v988
        %v990 = vrot.slane %v989, 1
        %v991 = vadd.f32 %v989, %v990
        %v992 = vsub.f32 0.0, %v973
        %v993 = vsub.f32 0.0, %v979
        %v994 = vsub.f32 0.0, %v985
        %v995 = vsub.f32 0.0, %v991
        %v996 = vsub.f32 %v867, %v870
        %v997 = vsub.f32 %v868, %v871
        %v998 = vand.u32 2147483647, %v996
        %v999 = vand.u32 2147483647, %v997
        %vm1000 = vcmp.lt.f32.partialorder %v998, 1.0
        %vm1001 = vcmp.lt.f32.partialorder %v999, 1.0
        %v1002 = vmul.f32 %v996, 0.5
        %v1003 = vmul.f32 %v997, 0.5
        %v1004 = vmul.f32 %v1002, %v996
        %v1005 = vmul.f32 %v1003, %v997
        %v1006 = vsub.f32 %v998, 0.5
        %v1007 = vsub.f32 %v999, 0.5
        %v1008 = vsel %vm1000, %v1004, %v1006
        %v1009 = vsel %vm1001, %v1005, %v1007
        %v1012 = vcombine.high %v1008, %v1008
        %v1013 = vcombine.high %v1009, %v1009
        %v1016 = vsel %vm666, %v1008, 0.0
        %v1017 = vrot.slane %v1016, 4
        %v1018 = vadd.f32 %v1016, %v1017
        %v1019 = vrot.slane %v1018, 2
        %v1020 = vadd.f32 %v1018, %v1019
        %v1021 = vrot.slane %v1020, 1
        %v1022 = vadd.f32 %v1020, %v1021
        %v1023 = vsel %vm666, %v1012, 0.0
        %v1024 = vrot.slane %v1023, 4
        %v1025 = vadd.f32 %v1023, %v1024
        %v1026 = vrot.slane %v1025, 2
        %v1027 = vadd.f32 %v1025, %v1026
        %v1028 = vrot.slane %v1027, 1
        %v1029 = vadd.f32 %v1027, %v1028
        %v1030 = vsel %vm666, %v1009, 0.0
        %v1031 = vrot.slane %v1030, 4
        %v1032 = vadd.f32 %v1030, %v1031
        %v1033 = vrot.slane %v1032, 2
        %v1034 = vadd.f32 %v1032, %v1033
        %v1035 = vrot.slane %v1034, 1
        %v1036 = vadd.f32 %v1034, %v1035
        %v1037 = vsel %vm666, %v1013, 0.0
        %v1038 = vrot.slane %v1037, 4
        %v1039 = vadd.f32 %v1037, %v1038
        %v1040 = vrot.slane %v1039, 2
        %v1041 = vadd.f32 %v1039, %v1040
        %v1042 = vrot.slane %v1041, 1
        %v1043 = vadd.f32 %v1041, %v1042
        %v1044 = vrcp.pop %v925
        %v1045 = vmul.f32 %v913, %v1044
        %v1046 = vrcp.pop %v931
        %v1047 = vmul.f32 %v915, %v1046
        %v1048 = vrcp.pop %v937
        %v1049 = vmul.f32 %v917, %v1048
        %v1050 = vrcp.pop %v943
        %v1051 = vmul.f32 %v919, %v1050
        %v1052 = vsub.f32 1.0, %v1045
        %v1053 = vsub.f32 1.0, %v1047
        %v1054 = vsub.f32 1.0, %v1049
        %v1055 = vsub.f32 1.0, %v1051
        %v1056 = vsub.f32 1.0, %v883
        %v1058 = vlaneseq
        %v1059 = vshrl.u32 %v1058, 7
        %v1060 = vsub.s32 0, %v1059
        %v1061 = vrot.slane %v1056, %v1060
        %v1062 = vlaneseq
        %v1063 = vshrl.u32 %v1062, 7
        %v1064 = vsub.s32 1, %v1063
        %v1065 = vrot.slane %v1056, %v1064
        %v1066 = vlaneseq
        %v1067 = vshrl.u32 %v1066, 7
        %v1068 = vsub.s32 2, %v1067
        %v1069 = vrot.slane %v1056, %v1068
        %v1070 = vlaneseq
        %v1071 = vshrl.u32 %v1070, 7
        %v1072 = vsub.s32 3, %v1071
        %v1073 = vrot.slane %v1056, %v1072
        %v1078 = vmul.f32 %v1052, %v1061
        %v1079 = vmul.f32 %v1053, %v1065
        %v1080 = vmul.f32 %v1054, %v1069
        %v1081 = vmul.f32 %v1055, %v1073
        %v1086 = vcombine.low %v992, %v993
        %v1087 = vcombine.low %v994, %v995
        %v1089 = vunpack.c.l.s4 1966171168
        %v1090 = vunpack.c.0.s8 %v1089
        %v1091 = vlaneseq
        %v1092 = vshrl.u32 %v1091, 7
        %v1093 = vsub.s32 %v1090, %v1092
        %v1094 = vrot.slane %v1086, %v1093
        %v1096 = vunpack.c.l.s4 1966171168
        %v1097 = vunpack.c.0.s8 %v1096
        %v1098 = vlaneseq
        %v1099 = vshrl.u32 %v1098, 7
        %v1100 = vsub.s32 %v1097, %v1099
        %v1101 = vrot.slane %v1087, %v1100
        %v1102 = vcombine.low %v1094, %v1101
        %v1104 = vunpack.c.l.s4 1966171168
        %v1105 = vunpack.c.0.s8 %v1104
        %v1106 = vlaneseq
        %v1107 = vshrl.u32 %v1106, 7
        %v1108 = vsub.s32 %v1105, %v1107
        %v1109 = vrot.slane %v1102, %v1108
        %s1111 = scalar_lea.vmem %s492, 1 [#allocation11]
        %1112 = vst.msk [vmem:[%s1111] ss:$2 sm:$0xf] %vm765, %v1109
        %v1117 = vcombine.low %v1078, %v1079
        %v1118 = vcombine.low %v1080, %v1081
        %v1120 = vunpack.c.l.s4 1966171168
        %v1121 = vunpack.c.0.s8 %v1120
        %v1122 = vlaneseq
        %v1123 = vshrl.u32 %v1122, 7
        %v1124 = vsub.s32 %v1121, %v1123
        %v1125 = vrot.slane %v1117, %v1124
        %v1127 = vunpack.c.l.s4 1966171168
        %v1128 = vunpack.c.0.s8 %v1127
        %v1129 = vlaneseq
        %v1130 = vshrl.u32 %v1129, 7
        %v1131 = vsub.s32 %v1128, %v1130
        %v1132 = vrot.slane %v1118, %v1131
        %v1133 = vcombine.low %v1125, %v1132
        %v1135 = vunpack.c.l.s4 1966171168
        %v1136 = vunpack.c.0.s8 %v1135
        %v1137 = vlaneseq
        %v1138 = vshrl.u32 %v1137, 7
        %v1139 = vsub.s32 %v1136, %v1138
        %v1140 = vrot.slane %v1133, %v1139
        %s1142 = scalar_lea.vmem %s499, 1 [#allocation12]
        %1143 = vst.msk [vmem:[%s1142] ss:$2 sm:$0xf] %vm765, %v1140
        %v1145 = vlaneseq
        %v1146 = vshrl.u32 %v1145, 7
        %v1147 = vsub.s32 0, %v1146
        %v1148 = vrot.slane %v883, %v1147
        %v1149 = vlaneseq
        %v1150 = vshrl.u32 %v1149, 7
        %v1151 = vsub.s32 1, %v1150
        %v1152 = vrot.slane %v883, %v1151
        %v1153 = vlaneseq
        %v1154 = vshrl.u32 %v1153, 7
        %v1155 = vsub.s32 2, %v1154
        %v1156 = vrot.slane %v883, %v1155
        %v1157 = vlaneseq
        %v1158 = vshrl.u32 %v1157, 7
        %v1159 = vsub.s32 3, %v1158
        %v1160 = vrot.slane %v883, %v1159
        %v1165 = vmul.f32 %v992, %v1148
        %v1166 = vmul.f32 %v993, %v1152
        %v1167 = vmul.f32 %v994, %v1156
        %v1168 = vmul.f32 %v995, %v1160
        %v1169 = vsel %vm822, %v1165, 0.0
        %v1170 = vsel %vm822, %v1166, 0.0
        %v1171 = vadd.f32 %v1169, %v1170
        %v1172 = vsel %vm822, %v1167, 0.0
        %v1173 = vadd.f32 %v1171, %v1172
        %v1174 = vsel %vm822, %v1168, 0.0
        %v1175 = vadd.f32 %v1173, %v1174
        %1176 = vadd.xlane.f32.xlu0 %v1175
        %v1177 = vpop.xlane.xlu0 %1176
        %v1178 = vmul.f32 %v1022, %v1148
        %v1179 = vmul.f32 %v1029, %v1152
        %v1180 = vmul.f32 %v1036, %v1156
        %v1181 = vmul.f32 %v1043, %v1160
        %v1182 = vsel %vm822, %v1178, 0.0
        %v1183 = vsel %vm822, %v1179, 0.0
        %v1184 = vadd.f32 %v1182, %v1183
        %v1185 = vsel %vm822, %v1180, 0.0
        %v1186 = vadd.f32 %v1184, %v1185
        %v1187 = vsel %vm822, %v1181, 0.0
        %v1188 = vadd.f32 %v1186, %v1187
        %1189 = vadd.xlane.f32.xlu0 %v1188
        %v1190 = vpop.xlane.xlu0 %1189
        %v1191 = vsel %vm822, %v1148, 0.0
        %v1192 = vsel %vm822, %v1152, 0.0
        %v1193 = vadd.f32 %v1191, %v1192
        %v1194 = vsel %vm822, %v1156, 0.0
        %v1195 = vadd.f32 %v1193, %v1194
        %v1196 = vsel %vm822, %v1160, 0.0
        %v1197 = vadd.f32 %v1195, %v1196
        %1198 = vadd.xlane.f32.xlu0 %v1197
        %v1199 = vpop.xlane.xlu0 %1198
        %v1200 = vsel %vm854, %v1177, 0.0
        %v1201 = vsel %vm856, %v1190, 0.0
        %v1202 = vadd.f32 %v1200, %v1201
        %v1203 = vsel %vm859, %v1199, 0.0
        %v1204 = vadd.f32 %v1202, %v1203
        %v1205 = vld [vmem:[#allocation14 + $0x1] sm:$0x1]
        %v1206 = vadd.f32 %v1205, %v1204
        %1207 = vst.msk [vmem:[#allocation14 + $0x1] sm:$0x1] %vm864, %v1206
        %s1208 = sand.u32 %s196, 1
        %s1209 = scalar_lea.sflag [#allocation4], %s1208
        %s1210 = sand.u32 %s196, 1
        %s1211 = smul.addr %s1210, 8
        %s1212 = scalar_lea.vmem [#allocation11], %s1211
        %s1213 = sand.u32 %s34, 1
        %s1214 = scalar_lea.sflag [#allocation13], %s1213
        %s1215 = sand.u32 %s224, 1
        %s1216 = smul.addr %s1215, 8
        %s1217 = scalar_lea.vmem [#allocation12], %s1216
        // Predicated region
        $region65: #{tpu_custom_call.1} parent=39 // pred_check
          %p1218 = pneg %p206
        $region66: #{tpu_custom_call.1} parent=39 // pred_check_branch
          %1220 = sbr.rel (%p1218) target = $region68
        $region67: #{tpu_custom_call.1} parent=39 // pred_region
          %s1221 = smul.u32 4, %s39
          %s1223 = ssub.s32 128, 128
          %1224 = vsyncadd %s1209, %s1223
          %s1225 = smul.addr %s38, 8
          %s1226 = sadd.s32 %s1221, %s1225
          %s1227 = smul.addr %s1226, 32
          %s1228 = scalar_lea.hbm %s5, %s1227
          %s1230 = sshll.u32 %s1212, 4
          %s1231 = int_to_ptr.vmem [resolvable:$true] %s1230
          %1233 = dma.vmem_to_hbm [thread:$0]  %s1231, 128, %s1228, %s1209
        $region68: #{tpu_custom_call.1} parent=39 // pred_fallthru
          _
        // Predicated region
        $region69: #{tpu_custom_call.1} parent=39 // pred_check
          %p1234 = pneg %p234
        $region70: #{tpu_custom_call.1} parent=39 // pred_check_branch
          %1236 = sbr.rel (%p1234) target = $region72
        $region71: #{tpu_custom_call.1} parent=39 // pred_region
          %s1237 = smul.u32 4, %s39
          %s1239 = ssub.s32 128, 128
          %1240 = vsyncadd %s1214, %s1239
          %s1241 = smul.addr %s38, 8
          %s1242 = sadd.s32 %s1237, %s1241
          %s1243 = smul.addr %s1242, 32
          %s1244 = scalar_lea.hbm %s6, %s1243
          %s1246 = sshll.u32 %s1217, 4
          %s1247 = int_to_ptr.vmem [resolvable:$true] %s1246
          %1249 = dma.vmem_to_hbm [thread:$0]  %s1247, 128, %s1244, %s1214
        $region72: #{tpu_custom_call.1} parent=39 // pred_fallthru
          _
        // Predicated region
        $region73: #{tpu_custom_call.1} parent=39 // pred_check
          %p1250 = pneg %p260
        $region74: #{tpu_custom_call.1} parent=39 // pred_check_branch
          %1252 = sbr.rel (%p1250) target = $region76
        $region75: #{tpu_custom_call.1} parent=39 // pred_region
          %s1254 = ssub.s32 32, 32
          %1255 = vsyncadd [#allocation13], %s1254
          %s1256 = smul.addr %s38, 32
          %s1257 = scalar_lea.hbm %s7, %s1256
          %s1259 = sshll.u32 [#allocation14], 4
          %s1260 = int_to_ptr.vmem [resolvable:$true] %s1259
          %1262 = dma.vmem_to_hbm [thread:$0]  %s1260, 32, %s1257, [#allocation13]
        $region76: #{tpu_custom_call.1} parent=39 // pred_fallthru
          _
        // Predicated region
        $region77: #{tpu_custom_call.1} parent=39 // pred_check
          %p1263 = pneg %p260
        $region78: #{tpu_custom_call.1} parent=39 // pred_check_branch
          %1265 = sbr.rel (%p1263) target = $region80
        $region79: #{tpu_custom_call.1} parent=39 // pred_region
          %1266 = dma.done [#allocation13], 32
        $region80: #{tpu_custom_call.1} parent=39 // pred_fallthru
          _
      $region40: #{tpu_custom_call.1} parent=5 // pred_fallthru
        _
      %p1267 = scmp.le.s32.totalorder 2, %s29
      // Predicated region
      $region81: #{tpu_custom_call.1} parent=5 // pred_check
        %p1268 = pneg %p1267
      $region82: #{tpu_custom_call.1} parent=5 // pred_check_branch
        %1270 = sbr.rel (%p1268) target = $region84
      $region83: #{tpu_custom_call.1} parent=5 // pred_region
        %s1271 = ssub.s32 %s29, 2
        // Predicated region
        $region85: #{tpu_custom_call.1} parent=83 // pred_check
          %p1272 = pneg %p212
        $region86: #{tpu_custom_call.1} parent=83 // pred_check_branch
          %1274 = sbr.rel (%p1272) target = $region88
        $region87: #{tpu_custom_call.1} parent=83 // pred_region
          %s1275 = sand.u32 %s197, 1
          %s1276 = scalar_lea.sflag [#allocation4], %s1275
          %s1277 = sand.u32 %s197, 1
          %s1278 = smul.addr %s1277, 8
          %s1279 = scalar_lea.vmem [#allocation11], %s1278
          %1280 = dma.done %s1276, 128
        $region88: #{tpu_custom_call.1} parent=83 // pred_fallthru
          _
        // Predicated region
        $region89: #{tpu_custom_call.1} parent=83 // pred_check
          %p1281 = pneg %p240
        $region90: #{tpu_custom_call.1} parent=83 // pred_check_branch
          %1283 = sbr.rel (%p1281) target = $region92
        $region91: #{tpu_custom_call.1} parent=83 // pred_region
          %s1284 = sand.u32 %s35, 1
          %s1285 = scalar_lea.sflag [#allocation13], %s1284
          %s1286 = sand.u32 %s225, 1
          %s1287 = smul.addr %s1286, 8
          %s1288 = scalar_lea.vmem [#allocation12], %s1287
          %1289 = dma.done %s1285, 128
        $region92: #{tpu_custom_call.1} parent=83 // pred_fallthru
          _
      $region84: #{tpu_custom_call.1} parent=5 // pred_fallthru
        _
    $region6: #{tpu_custom_call.1} parent=1 // loop_footer
      %s33 = sadd.s32 1, %s29
    $region7: #{tpu_custom_call.1} parent=1 // loop_footer_branch
      %28 = sbr.rel target = $region3
    $region8: #{tpu_custom_call.1} parent=1 // loop_exit
      _
    %1290 = vsyncpa [#allocation3], 1
    %s1291 = scalar_lea.sflag [#allocation3], 1
    %1292 = vsyncpa %s1291, 1
    %1293 = vsyncpa [#allocation6], 1
    %s1294 = scalar_lea.sflag [#allocation6], 1
    %1295 = vsyncpa %s1294, 1
    %1296 = vsyncpa [#allocation9], 1
    %s1297 = scalar_lea.sflag [#allocation9], 1
    %1298 = vsyncpa %s1297, 1
    %1299 = vsyncpa [#allocation4], 1
    %s1300 = scalar_lea.sflag [#allocation4], 1
    %1301 = vsyncpa %s1300, 1
    %1302 = vsyncpa [#allocation13], 1
    %s1303 = scalar_lea.sflag [#allocation13], 1
    %1304 = vsyncpa %s1303, 1

</llo_original>
